<compile_context>
chip_gen: v5e
topology: v5e:2x2
jax: 0.10.0
libtpu: 0.0.40
codegen_flags: <defaults>
</compile_context>

<pallas_src>
import jax
import jax.numpy as jnp
from jax.experimental import pallas as pl
from jax.experimental.pallas import tpu as pltpu


def _atan_f32(u):
    """float32 arctan from basic VPU ops (Cephes range reduction + minimax poly)."""
    a = jnp.abs(u)
    sgn = jnp.where(u < 0.0, -1.0, 1.0).astype(u.dtype)
    tan3pi8 = 2.414213562373095      # tan(3*pi/8)
    tanpi8 = 0.4142135623730950      # tan(pi/8)
    big = a > tan3pi8
    mid = jnp.logical_and(a > tanpi8, jnp.logical_not(big))
    a_safe = jnp.maximum(a, 1e-30)   # keep the unselected 1/a branch finite
    x = jnp.where(big, -1.0 / a_safe, jnp.where(mid, (a - 1.0) / (a + 1.0), a))
    y0 = jnp.where(big, jnp.pi / 2, jnp.where(mid, jnp.pi / 4, 0.0)).astype(u.dtype)
    z = x * x
    p = (((8.05374449538e-2 * z - 1.38776856032e-1) * z
          + 1.99777106478e-1) * z - 3.33329491539e-1)
    return sgn * (y0 + p * z * x + x)


def dendrite_kernel(x_ref, w_ref, q_ref, o_ref):
    # x_ref: (1, K, TP) patch tile of one image (K on sublanes, patches on lanes)
    # w_ref / q_ref: (N, K, 1) parameters, lane-broadcast inside the kernel
    # o_ref: (1, N, TP) lane-dense output tile
    x = x_ref[0]                                   # (K, TP)
    w = w_ref[...]                                 # (N, K, 1)
    q = q_ref[...]                                 # (N, K, 1)
    u = 10.0 * (x[None, :, :] * w - q)             # (N, K, TP)
    y = (jnp.pi + 2.0 * _atan_f32(u)) * (0.5 / jnp.pi)
    y = jnp.log(y + 0.6)
    o_ref[0] = jnp.sum(y, axis=1)                  # reduce K -> (N, TP)


@jax.jit
def dendrite_forward(x, w, q):
    """x: (B, img, img); w, q: (num, side, side) -> (B, out, out, num)."""
    B, img, _ = x.shape
    N, side, _ = w.shape
    out = img - side + 1
    K = side * side
    P = out * out
    Ppad = ((P + 127) // 128) * 128                # lane-dense padding (mult. of 128)
    TP = min(Ppad, 2048)                           # patch tile (bounds VMEM); mult of 128
    T = Ppad // TP

    # im2col (stride-1 unfold): patches[b, di*side+dj, i*out+j] = x[b, i+di, j+dj]
    patches = jnp.stack(
        [jnp.stack([x[:, di:di + out, dj:dj + out] for dj in range(side)], axis=-1)
         for di in range(side)], axis=-2)          # (B, out, out, side, side)
    patches = patches.reshape(B, P, K).transpose(0, 2, 1)         # (B, K, P)
    patches = jnp.pad(patches, ((0, 0), (0, 0), (0, Ppad - P)))
    patches = patches.astype(jnp.float32)

    w3 = w.reshape(N, K, 1).astype(jnp.float32)
    q3 = q.reshape(N, K, 1).astype(jnp.float32)

    cost = pl.CostEstimate(
        flops=int(20 * B * N * K * Ppad),
        transcendentals=int(B * N * K * Ppad),
        bytes_accessed=int(4 * (B * K * Ppad + 2 * N * K + B * N * Ppad)),
    )

    y = pl.pallas_call(
        dendrite_kernel,
        out_shape=jax.ShapeDtypeStruct((B, N, Ppad), jnp.float32),
        grid_spec=pltpu.PrefetchScalarGridSpec(
            num_scalar_prefetch=0,
            grid=(B, T),
            in_specs=[
                pl.BlockSpec((1, K, TP), lambda b, t: (b, 0, t)),
                pl.BlockSpec((N, K, 1), lambda b, t: (0, 0, 0)),
                pl.BlockSpec((N, K, 1), lambda b, t: (0, 0, 0)),
            ],
            out_specs=pl.BlockSpec((1, N, TP), lambda b, t: (b, 0, t)),
        ),
        compiler_params=pltpu.CompilerParams(
            dimension_semantics=("parallel", "parallel")),
        cost_estimate=cost,
    )(patches, w3, q3)

    y = y[:, :, :P]                                # drop lane padding
    y = jnp.transpose(y, (0, 2, 1))                # (B, P, N)
    return y.reshape(B, out, out, N)


def dendrite_ref(x, w, q):
    """Plain-JAX reference, faithful to the PyTorch forward."""
    num, side, _ = w.shape
    B, img, _ = x.shape
    out = img - side + 1
    patches = jnp.stack(
        [jnp.stack([x[:, di:di + out, dj:dj + out] for dj in range(side)], axis=-1)
         for di in range(side)], axis=-2)          # (B, out, out, side, side)
    xb = patches[:, :, :, None, :, :]              # (B, out, out, 1, side, side)
    y = (jnp.pi + 2.0 * jnp.arctan(10.0 * (xb * w - q))) / (2.0 * jnp.pi)
    y = jnp.log(jnp.prod(y + 0.6, axis=5))
    return jnp.sum(y, axis=4)                      # (B, out, out, num)


if __name__ == "__main__":
    key = jax.random.PRNGKey(0)
    kx, kw, kq = jax.random.split(key, 3)

    batch, img_size, side, num = 2, 16, 5, 4       # out = 12, K = 25, P = 144

    x = jax.random.uniform(kx, (batch, img_size, img_size), dtype=jnp.float32)
    w = jax.random.normal(kw, (num, side, side), dtype=jnp.float32)
    q = jax.random.normal(kq, (num, side, side), dtype=jnp.float32) * 0.5

    y = dendrite_forward(x, w, q)
    y = jax.block_until_ready(y)

    y_ref = dendrite_ref(x, w, q)
    out = img_size - side + 1
    assert y.shape == (batch, out, out, num)
    assert jnp.allclose(y, y_ref, atol=1e-3, rtol=1e-3), float(
        jnp.max(jnp.abs(y - y_ref)))

    print("KERNEL_OK")
</pallas_src>

<mosaic_0001>
module attributes {stable_mosaic.version = 11 : i64} {
  func.func @dendrite_kernel(%arg0: i32, %arg1: i32, %arg2: memref<1x25x256xf32, #tpu.memory_space<vmem>>, %arg3: memref<4x25x1xf32, #tpu.memory_space<vmem>>, %arg4: memref<4x25x1xf32, #tpu.memory_space<vmem>>, %arg5: memref<1x4x256xf32, #tpu.memory_space<vmem>>) attributes {dimension_semantics = [#tpu.dimension_semantics<parallel>, #tpu.dimension_semantics<parallel>], iteration_bounds = array<i64: 2, 1>, scalar_prefetch = 0 : i64, scratch_operands = 0 : i64, tpu.core_type = #tpu.core_type<tc>, window_params = [{transform_indices = @transform_0, window_bounds = array<i64: 1, 25, 256>}, {pipeline_mode = #tpu.pipeline_mode<synchronous>, transform_indices = @transform_1, window_bounds = array<i64: 4, 25, 1>}, {pipeline_mode = #tpu.pipeline_mode<synchronous>, transform_indices = @transform_2, window_bounds = array<i64: 4, 25, 1>}, {transform_indices = @transform_3, window_bounds = array<i64: 1, 4, 256>}]} {
    %c0 = arith.constant 0 : index
    %c0_0 = arith.constant 0 : index
    %c0_1 = arith.constant 0 : index
    %0 = vector.load %arg2[%c0, %c0_0, %c0_1] : memref<1x25x256xf32, #tpu.memory_space<vmem>>, vector<1x25x256xf32>
    %1 = vector.shape_cast %0 : vector<1x25x256xf32> to vector<25x256xf32>
    %c0_2 = arith.constant 0 : index
    %c0_3 = arith.constant 0 : index
    %c0_4 = arith.constant 0 : index
    %2 = vector.load %arg3[%c0_2, %c0_3, %c0_4] : memref<4x25x1xf32, #tpu.memory_space<vmem>>, vector<4x25x1xf32>
    %c0_5 = arith.constant 0 : index
    %c0_6 = arith.constant 0 : index
    %c0_7 = arith.constant 0 : index
    %3 = vector.load %arg4[%c0_5, %c0_6, %c0_7] : memref<4x25x1xf32, #tpu.memory_space<vmem>>, vector<4x25x1xf32>
    %4 = vector.shape_cast %1 : vector<25x256xf32> to vector<1x25x256xf32>
    %5 = vector.broadcast %4 : vector<1x25x256xf32> to vector<4x25x256xf32>
    %6 = vector.broadcast %2 : vector<4x25x1xf32> to vector<4x25x256xf32>
    %7 = arith.mulf %5, %6 : vector<4x25x256xf32>
    %8 = vector.broadcast %3 : vector<4x25x1xf32> to vector<4x25x256xf32>
    %9 = arith.subf %7, %8 : vector<4x25x256xf32>
    %cst = arith.constant 1.000000e+01 : f32
    %10 = vector.broadcast %cst : f32 to vector<4x25x256xf32>
    %11 = arith.mulf %10, %9 : vector<4x25x256xf32>
    %12 = math.absf %11 : vector<4x25x256xf32>
    %cst_8 = arith.constant 0.000000e+00 : f32
    %13 = vector.broadcast %cst_8 : f32 to vector<4x25x256xf32>
    %14 = arith.cmpf olt, %11, %13 : vector<4x25x256xf32>
    %cst_9 = arith.constant -1.000000e+00 : f32
    %cst_10 = arith.constant 1.000000e+00 : f32
    %15 = vector.broadcast %cst_9 : f32 to vector<4x25x256xf32>
    %16 = vector.broadcast %cst_10 : f32 to vector<4x25x256xf32>
    %17 = arith.select %14, %15, %16 : vector<4x25x256xi1>, vector<4x25x256xf32>
    %cst_11 = arith.constant 2.41421366 : f32
    %18 = vector.broadcast %cst_11 : f32 to vector<4x25x256xf32>
    %19 = arith.cmpf ogt, %12, %18 : vector<4x25x256xf32>
    %cst_12 = arith.constant 0.414213568 : f32
    %20 = vector.broadcast %cst_12 : f32 to vector<4x25x256xf32>
    %21 = arith.cmpf ogt, %12, %20 : vector<4x25x256xf32>
    %cst_13 = arith.constant dense<true> : vector<4x25x256xi1>
    %22 = arith.xori %19, %cst_13 : vector<4x25x256xi1>
    %23 = arith.andi %21, %22 : vector<4x25x256xi1>
    %cst_14 = arith.constant 1.000000e-30 : f32
    %24 = vector.broadcast %cst_14 : f32 to vector<4x25x256xf32>
    %25 = arith.maximumf %12, %24 : vector<4x25x256xf32>
    %cst_15 = arith.constant -1.000000e+00 : f32
    %26 = vector.broadcast %cst_15 : f32 to vector<4x25x256xf32>
    %27 = arith.divf %26, %25 : vector<4x25x256xf32>
    %cst_16 = arith.constant 1.000000e+00 : f32
    %28 = vector.broadcast %cst_16 : f32 to vector<4x25x256xf32>
    %29 = arith.subf %12, %28 : vector<4x25x256xf32>
    %cst_17 = arith.constant 1.000000e+00 : f32
    %30 = vector.broadcast %cst_17 : f32 to vector<4x25x256xf32>
    %31 = arith.addf %12, %30 : vector<4x25x256xf32>
    %32 = arith.divf %29, %31 : vector<4x25x256xf32>
    %33 = arith.select %23, %32, %12 : vector<4x25x256xi1>, vector<4x25x256xf32>
    %34 = arith.select %19, %27, %33 : vector<4x25x256xi1>, vector<4x25x256xf32>
    %cst_18 = arith.constant 0.785398185 : f32
    %cst_19 = arith.constant 0.000000e+00 : f32
    %35 = vector.broadcast %cst_18 : f32 to vector<4x25x256xf32>
    %36 = vector.broadcast %cst_19 : f32 to vector<4x25x256xf32>
    %37 = arith.select %23, %35, %36 : vector<4x25x256xi1>, vector<4x25x256xf32>
    %cst_20 = arith.constant 1.57079637 : f32
    %38 = vector.broadcast %cst_20 : f32 to vector<4x25x256xf32>
    %39 = arith.select %19, %38, %37 : vector<4x25x256xi1>, vector<4x25x256xf32>
    %40 = arith.mulf %34, %34 : vector<4x25x256xf32>
    %cst_21 = arith.constant 0.0805374458 : f32
    %41 = vector.broadcast %cst_21 : f32 to vector<4x25x256xf32>
    %42 = arith.mulf %41, %40 : vector<4x25x256xf32>
    %cst_22 = arith.constant 0.138776854 : f32
    %43 = vector.broadcast %cst_22 : f32 to vector<4x25x256xf32>
    %44 = arith.subf %42, %43 : vector<4x25x256xf32>
    %45 = arith.mulf %44, %40 : vector<4x25x256xf32>
    %cst_23 = arith.constant 0.199777111 : f32
    %46 = vector.broadcast %cst_23 : f32 to vector<4x25x256xf32>
    %47 = arith.addf %45, %46 : vector<4x25x256xf32>
    %48 = arith.mulf %47, %40 : vector<4x25x256xf32>
    %cst_24 = arith.constant 0.333329499 : f32
    %49 = vector.broadcast %cst_24 : f32 to vector<4x25x256xf32>
    %50 = arith.subf %48, %49 : vector<4x25x256xf32>
    %51 = arith.mulf %50, %40 : vector<4x25x256xf32>
    %52 = arith.mulf %51, %34 : vector<4x25x256xf32>
    %53 = arith.addf %39, %52 : vector<4x25x256xf32>
    %54 = arith.addf %53, %34 : vector<4x25x256xf32>
    %55 = arith.mulf %17, %54 : vector<4x25x256xf32>
    %cst_25 = arith.constant 2.000000e+00 : f32
    %56 = vector.broadcast %cst_25 : f32 to vector<4x25x256xf32>
    %57 = arith.mulf %56, %55 : vector<4x25x256xf32>
    %cst_26 = arith.constant 3.14159274 : f32
    %58 = vector.broadcast %cst_26 : f32 to vector<4x25x256xf32>
    %59 = arith.addf %58, %57 : vector<4x25x256xf32>
    %cst_27 = arith.constant 0.159154937 : f32
    %60 = vector.broadcast %cst_27 : f32 to vector<4x25x256xf32>
    %61 = arith.mulf %59, %60 : vector<4x25x256xf32>
    %cst_28 = arith.constant 6.000000e-01 : f32
    %62 = vector.broadcast %cst_28 : f32 to vector<4x25x256xf32>
    %63 = arith.addf %61, %62 : vector<4x25x256xf32>
    %64 = math.log %63 : vector<4x25x256xf32>
    %cst_29 = arith.constant dense<0.000000e+00> : vector<4x256xf32>
    %65 = vector.multi_reduction <add>, %64, %cst_29 [1] : vector<4x25x256xf32> to vector<4x256xf32>
    %c0_30 = arith.constant 0 : index
    %c0_31 = arith.constant 0 : index
    %c0_32 = arith.constant 0 : index
    %66 = vector.load %arg5[%c0_30, %c0_31, %c0_32] : memref<1x4x256xf32, #tpu.memory_space<vmem>>, vector<1x4x256xf32>
    %67 = vector.shape_cast %66 : vector<1x4x256xf32> to vector<4x256xf32>
    %68 = vector.shape_cast %65 : vector<4x256xf32> to vector<1x4x256xf32>
    tpu.vector_store %arg5[%c0_30, %c0_31, %c0_32], %68 {strides = array<i32>} : memref<1x4x256xf32, #tpu.memory_space<vmem>>, vector<1x4x256xf32>,
    return
  }
  func.func @transform_0(%arg0: i32, %arg1: i32) -> (i32, i32, i32) {
    %c0_i32 = arith.constant 0 : i32
    %c0_i32_0 = arith.constant 0 : i32
    return %arg0, %c0_i32, %arg1 : i32, i32, i32
  }
  func.func @transform_1(%arg0: i32, %arg1: i32) -> (i32, i32, i32) {
    %c0_i32 = arith.constant 0 : i32
    %c0_i32_0 = arith.constant 0 : i32
    %c0_i32_1 = arith.constant 0 : i32
    %c0_i32_2 = arith.constant 0 : i32
    return %c0_i32, %c0_i32_0, %c0_i32_1 : i32, i32, i32
  }
  func.func @transform_2(%arg0: i32, %arg1: i32) -> (i32, i32, i32) {
    %c0_i32 = arith.constant 0 : i32
    %c0_i32_0 = arith.constant 0 : i32
    %c0_i32_1 = arith.constant 0 : i32
    %c0_i32_2 = arith.constant 0 : i32
    return %c0_i32, %c0_i32_0, %c0_i32_1 : i32, i32, i32
  }
  func.func @transform_3(%arg0: i32, %arg1: i32) -> (i32, i32, i32) {
    %c0_i32 = arith.constant 0 : i32
    %c0_i32_0 = arith.constant 0 : i32
    return %arg0, %c0_i32, %arg1 : i32, i32, i32
  }
}

</mosaic_0001>

<llo_original>
// kernel: dendrite_forward.1
$region0: #{dendrite_forward.1}
  #allocation0 [shape = 'u32[]', space=smem, size = 0x4, offset = 0x4, fixed_abs, tag = 'smem constant byte address 0x4 - core index']
  #allocation1 [shape = 'u32[72,128]{1,0:T(1,128)}', space=vmem, size = 0x9000, scoped, tag = 'internal scratch']
  %s0 = inlined_call_operand.vmem [shape: f32[2,25,256], index: 0, kind: input, shape index: {}]
  %s1 = inlined_call_operand.vmem [shape: f32[4,25,1], index: 1, kind: input, shape index: {}]
  %s2 = inlined_call_operand.vmem [shape: f32[4,25,1], index: 2, kind: input, shape index: {}]
  %s3 = inlined_call_operand.vmem [shape: f32[2,4,256], index: 3, kind: output, shape index: {}]
  %s4 = sld [smem:[#allocation0]]
  $region45: #{dendrite_forward.1} parent=0
    _
  %s6 = ssub.s32 1, %s4
  %s7 = scalar_select 0, %s6, %s4
  loop: start=0, step=1, limit=4
  $region2: #{dendrite_forward.1} parent=0 // loop_pre_header
    _
  $region3: #{dendrite_forward.1} parent=0 // loop_header
    %s9 = sphi 0, %s13
    %p10 = scmp.ge.s32.totalorder %s9, 4
    %s16 = sphi 0, %s28
    %s17 = sphi 0, %s24
    %s18 = sphi 0, %s16
    %s19 = sphi 0, %s17
    %s20 = sphi 0, %s18
    %s21 = sphi 0, %s19
    %s33 = sphi 0, %s35
    %s36 = sphi 0, %s33
    %s37 = sphi 0, %s36
    %s53 = sphi 0, %s37
    %s57 = sphi 0, %s57
    %s59 = sphi 0, %s57
    %s60 = sphi 0, %s59
    %s74 = sphi 0, %s60
    %s78 = sphi 0, %s78
    %s80 = sphi 0, %s78
    %s81 = sphi 0, %s80
    %s95 = sphi 0, %s81
    %s103 = sphi 0, %s105
    %s106 = sphi 0, %s103
    %s107 = sphi 0, %s106
    %s123 = sphi 0, %s107
  $region4: #{dendrite_forward.1} parent=0 // loop_header_branch
    %12 = sbr.rel (%p10) target = $region8
  $region5: #{dendrite_forward.1} parent=0 // loop_body
    %s14 = ssub.s32 %s9, 1
    %s15 = ssub.s32 %s9, 2
    %s22 = sadd.s32 1, %s17
    %p23 = scmp.ge.s32.totalorder %s22, 1
    %s24 = scalar_select %p23, 0, %s22
    %s25 = sadd.s32 1, %s16
    %s26 = scalar_select %p23, %s25, %s16
    %p27 = scmp.ge.s32.totalorder %s26, 2
    %s28 = scalar_select %p27, 0, %s26
    %s29 = ssub.s32 %s16, %s28
    %s30 = ssub.s32 %s17, %s24
    %s31 = sor.u32 %s29, %s30
    %p32 = scmp.eq.s32.totalorder %s31, 0
    %s34 = sadd.s32 %s33, 1
    %s35 = scalar_select %p32, %s33, %s34
    %p38 = pneg %p32
    %p39 = scmp.eq.s32.totalorder %s9, 1
    %p40 = por %p38, %p39
    %p41 = scmp.ne.s32.totalorder %s33, %s36
    %p42 = scmp.eq.s32.totalorder %s9, 0
    %p43 = por %p41, %p42
    %p44 = scmp.ne.s32.totalorder %s33, %s36
    %p45 = scmp.eq.s32.totalorder %s14, 1
    %p46 = por %p44, %p45
    %p47 = scmp.ne.s32.totalorder %s36, %s37
    %p48 = scmp.eq.s32.totalorder %s14, 0
    %p49 = por %p47, %p48
    %p50 = scmp.ne.s32.totalorder %s36, %s37
    %p51 = scmp.eq.s32.totalorder %s15, 1
    %p52 = por %p50, %p51
    %p54 = scmp.ne.s32.totalorder %s37, %s53
    %p55 = scmp.eq.s32.totalorder %s15, 0
    %p56 = por %p54, %p55
    %s58 = sadd.s32 %s57, 1
    %p61 = scmp.eq.s32.totalorder %s9, 1
    %p62 = scmp.ne.s32.totalorder %s57, %s59
    %p63 = scmp.eq.s32.totalorder %s9, 0
    %p64 = por %p62, %p63
    %p65 = scmp.ne.s32.totalorder %s57, %s59
    %p66 = scmp.eq.s32.totalorder %s14, 1
    %p67 = por %p65, %p66
    %p68 = scmp.ne.s32.totalorder %s59, %s60
    %p69 = scmp.eq.s32.totalorder %s14, 0
    %p70 = por %p68, %p69
    %p71 = scmp.ne.s32.totalorder %s59, %s60
    %p72 = scmp.eq.s32.totalorder %s15, 1
    %p73 = por %p71, %p72
    %p75 = scmp.ne.s32.totalorder %s60, %s74
    %p76 = scmp.eq.s32.totalorder %s15, 0
    %p77 = por %p75, %p76
    %s79 = sadd.s32 %s78, 1
    %p82 = scmp.eq.s32.totalorder %s9, 1
    %p83 = scmp.ne.s32.totalorder %s78, %s80
    %p84 = scmp.eq.s32.totalorder %s9, 0
    %p85 = por %p83, %p84
    %p86 = scmp.ne.s32.totalorder %s78, %s80
    %p87 = scmp.eq.s32.totalorder %s14, 1
    %p88 = por %p86, %p87
    %p89 = scmp.ne.s32.totalorder %s80, %s81
    %p90 = scmp.eq.s32.totalorder %s14, 0
    %p91 = por %p89, %p90
    %p92 = scmp.ne.s32.totalorder %s80, %s81
    %p93 = scmp.eq.s32.totalorder %s15, 1
    %p94 = por %p92, %p93
    %p96 = scmp.ne.s32.totalorder %s81, %s95
    %p97 = scmp.eq.s32.totalorder %s15, 0
    %p98 = por %p96, %p97
    %s99 = ssub.s32 %s16, %s28
    %s100 = ssub.s32 %s17, %s24
    %s101 = sor.u32 %s99, %s100
    %p102 = scmp.eq.s32.totalorder %s101, 0
    %s104 = sadd.s32 %s103, 1
    %s105 = scalar_select %p102, %s103, %s104
    %p108 = pneg %p102
    %p109 = scmp.eq.s32.totalorder %s9, 1
    %p110 = por %p108, %p109
    %p111 = scmp.ne.s32.totalorder %s103, %s106
    %p112 = scmp.eq.s32.totalorder %s9, 0
    %p113 = por %p111, %p112
    %p114 = scmp.ne.s32.totalorder %s103, %s106
    %p115 = scmp.eq.s32.totalorder %s14, 1
    %p116 = por %p114, %p115
    %p117 = scmp.ne.s32.totalorder %s106, %s107
    %p118 = scmp.eq.s32.totalorder %s14, 0
    %p119 = por %p117, %p118
    %p120 = scmp.ne.s32.totalorder %s106, %s107
    %p121 = scmp.eq.s32.totalorder %s15, 1
    %p122 = por %p120, %p121
    %p124 = scmp.ne.s32.totalorder %s107, %s123
    %p125 = scmp.eq.s32.totalorder %s15, 0
    %p126 = por %p124, %p125
    %p127 = scmp.le.s32.totalorder 1, %s9
    %p128 = scmp.lt.s32.totalorder %s9, 3
    %p129 = pnand %p127, %p128
    %p130 = pneg %p129
    // Predicated region
    $region9: #{dendrite_forward.1} parent=5 // pred_check
      _
    $region10: #{dendrite_forward.1} parent=5 // pred_check_branch
      %132 = sbr.rel (%p129) target = $region12
    $region11: #{dendrite_forward.1} parent=5 // pred_region
      %s133 = ssub.s32 %s9, 1
      // Predicated region
      $region13: #{dendrite_forward.1} parent=11 // pred_check
        %p134 = pneg %p70
      $region14: #{dendrite_forward.1} parent=11 // pred_check_branch
        %136 = sbr.rel (%p134) target = $region16
      $region15: #{dendrite_forward.1} parent=11 // pred_region
        _
      $region16: #{dendrite_forward.1} parent=11 // pred_fallthru
        _
      // Predicated region
      $region17: #{dendrite_forward.1} parent=11 // pred_check
        %p137 = pneg %p91
      $region18: #{dendrite_forward.1} parent=11 // pred_check_branch
        %139 = sbr.rel (%p137) target = $region20
      $region19: #{dendrite_forward.1} parent=11 // pred_region
        _
      $region20: #{dendrite_forward.1} parent=11 // pred_fallthru
        _
    $region12: #{dendrite_forward.1} parent=5 // pred_fallthru
      _
    %p140 = scmp.lt.s32.totalorder %s9, 2
    // Predicated region
    $region21: #{dendrite_forward.1} parent=5 // pred_check
      %p141 = pneg %p140
    $region22: #{dendrite_forward.1} parent=5 // pred_check_branch
      %143 = sbr.rel (%p141) target = $region24
    $region23: #{dendrite_forward.1} parent=5 // pred_region
      // Predicated region
      $region25: #{dendrite_forward.1} parent=23 // pred_check
        %p144 = pneg %p43
      $region26: #{dendrite_forward.1} parent=23 // pred_check_branch
        %146 = sbr.rel (%p144) target = $region28
      $region27: #{dendrite_forward.1} parent=23 // pred_region
        %s147 = smul.u32 2, %s17
        %p148 = scmp.lt.s32.totalorder %s16, 1
        %s149 = scalar_select %p148, %s16, 1
        %p150 = scmp.lt.s32.totalorder %s147, 1
        %s151 = scalar_select %p150, %s147, 1
        %s152 = smul.addr %s149, 8
        %s153 = sadd.s32 %s151, %s152
        %s154 = smul.addr %s153, 8
        %s155 = scalar_lea.vmem %s0, %s154
        %s156 = smul.u32 2, %s17
      $region28: #{dendrite_forward.1} parent=23 // pred_fallthru
        _
    $region24: #{dendrite_forward.1} parent=5 // pred_fallthru
      _
    %p157 = scmp.le.s32.totalorder 1, %s9
    %p158 = scmp.lt.s32.totalorder %s9, 3
    %p159 = pnand %p157, %p158
    %p160 = pneg %p159
    // Predicated region
    $region29: #{dendrite_forward.1} parent=5 // pred_check
      _
    $region30: #{dendrite_forward.1} parent=5 // pred_check_branch
      %162 = sbr.rel (%p159) target = $region32
    $region31: #{dendrite_forward.1} parent=5 // pred_region
      %s163 = ssub.s32 %s9, 1
      %s164 = smul.u32 2, %s19
      %p165 = scmp.lt.s32.totalorder %s18, 1
      %s166 = scalar_select %p165, %s18, 1
      %p167 = scmp.lt.s32.totalorder %s164, 1
      %s168 = scalar_select %p167, %s164, 1
      %s169 = smul.addr %s166, 8
      %s170 = sadd.s32 %s168, %s169
      %s171 = smul.addr %s170, 8
      %s172 = scalar_lea.vmem %s0, %s171
      %p173 = pneg %p49
      %p174 = pneg %p46
      %p175 = pneg %p70
      %p176 = pneg %p67
      %p177 = pneg %p91
      %p178 = pneg %p88
      %p179 = pneg %p119
      %p180 = pneg %p116
      %s181 = smul.u32 2, %s19
      %p182 = scmp.lt.s32.totalorder %s18, 1
      %s183 = scalar_select %p182, %s18, 1
      %p184 = scmp.lt.s32.totalorder %s181, 1
      %s185 = scalar_select %p184, %s181, 1
      %s186 = smul.addr %s183, 2
      %s187 = sadd.s32 %s185, %s186
      %s188 = smul.addr %s187, 4
      %s189 = scalar_lea.vmem %s3, %s188
      %s190 = smul.u32 2, %s19
      %p191 = scmp.lt.s32.totalorder %s18, 1
      %s192 = scalar_select %p191, %s18, 1
      %p193 = scmp.lt.s32.totalorder %s190, 1
      %s194 = scalar_select %p193, %s190, 1
      %s195 = smul.addr %s192, 8
      %s196 = sadd.s32 %s194, %s195
      %s197 = smul.addr %s196, 8
      %s198 = scalar_lea.vmem %s0, %s197
      %s199 = smul.u32 2, %s19
      %s200 = smul.u32 2, %s19
      %p201 = scmp.lt.s32.totalorder %s18, 1
      %s202 = scalar_select %p201, %s18, 1
      %p203 = scmp.lt.s32.totalorder %s200, 1
      %s204 = scalar_select %p203, %s200, 1
      %s205 = smul.addr %s202, 2
      %s206 = sadd.s32 %s204, %s205
      %s207 = smul.addr %s206, 4
      %s208 = scalar_lea.vmem %s3, %s207
      %s209 = smul.u32 2, %s19
      %v210 = vld [vmem:[%s198] sm:$0xff]
      %v211 = vld [vmem:[%s198 + $0x8] sm:$0xff]
      %v212 = vld [vmem:[%s198 + $0x10] sm:$0xff]
      %v213 = vld [vmem:[%s198 + $0x18] sm:$0xff]
      %v214 = vld [vmem:[%s198 + $0x20] sm:$0xff]
      %v215 = vld [vmem:[%s198 + $0x28] sm:$0xff]
      %v216 = vld [vmem:[%s198 + $0x30] sm:$0x1]
      %v217 = vld [vmem:[%s198 + $0x38] sm:$0x1]
      %v218 = vld [vmem:[%s1] sm:$0xff]
      %v219 = vld [vmem:[%s1 + $0x8] sm:$0xff]
      %v220 = vld [vmem:[%s1 + $0x10] sm:$0xff]
      %v221 = vld [vmem:[%s1 + $0x18] sm:$0x1]
      %v222 = vld [vmem:[%s1 + $0x20] sm:$0xff]
      %v223 = vld [vmem:[%s1 + $0x28] sm:$0xff]
      %v224 = vld [vmem:[%s1 + $0x30] sm:$0xff]
      %v225 = vld [vmem:[%s1 + $0x38] sm:$0x1]
      %v226 = vld [vmem:[%s1 + $0x40] sm:$0xff]
      %v227 = vld [vmem:[%s1 + $0x48] sm:$0xff]
      %v228 = vld [vmem:[%s1 + $0x50] sm:$0xff]
      %v229 = vld [vmem:[%s1 + $0x58] sm:$0x1]
      %v230 = vld [vmem:[%s1 + $0x60] sm:$0xff]
      %v231 = vld [vmem:[%s1 + $0x68] sm:$0xff]
      %v232 = vld [vmem:[%s1 + $0x70] sm:$0xff]
      %v233 = vld [vmem:[%s1 + $0x78] sm:$0x1]
      %v234 = vld [vmem:[%s2] sm:$0xff]
      %v235 = vld [vmem:[%s2 + $0x8] sm:$0xff]
      %v236 = vld [vmem:[%s2 + $0x10] sm:$0xff]
      %v237 = vld [vmem:[%s2 + $0x18] sm:$0x1]
      %v238 = vld [vmem:[%s2 + $0x20] sm:$0xff]
      %v239 = vld [vmem:[%s2 + $0x28] sm:$0xff]
      %v240 = vld [vmem:[%s2 + $0x30] sm:$0xff]
      %v241 = vld [vmem:[%s2 + $0x38] sm:$0x1]
      %v242 = vld [vmem:[%s2 + $0x40] sm:$0xff]
      %v243 = vld [vmem:[%s2 + $0x48] sm:$0xff]
      %v244 = vld [vmem:[%s2 + $0x50] sm:$0xff]
      %v245 = vld [vmem:[%s2 + $0x58] sm:$0x1]
      %v246 = vld [vmem:[%s2 + $0x60] sm:$0xff]
      %v247 = vld [vmem:[%s2 + $0x68] sm:$0xff]
      %v248 = vld [vmem:[%s2 + $0x70] sm:$0xff]
      %v249 = vld [vmem:[%s2 + $0x78] sm:$0x1]
      %251 = vset.pattern.permute.xlu0 0
      %252 = vperm.xlu0 %251, %v218
      %v253 = vpop.permute.xlu0 %252
      %256 = vset.pattern.permute.xlu0 0
      %257 = vperm.xlu0 %256, %v219
      %v258 = vpop.permute.xlu0 %257
      %261 = vset.pattern.permute.xlu0 0
      %262 = vperm.xlu0 %261, %v220
      %v263 = vpop.permute.xlu0 %262
      %266 = vset.pattern.permute.xlu0 0
      %267 = vperm.xlu0 %266, %v221
      %v268 = vpop.permute.xlu0 %267
      %271 = vset.pattern.permute.xlu0 0
      %272 = vperm.xlu0 %271, %v222
      %v273 = vpop.permute.xlu0 %272
      %276 = vset.pattern.permute.xlu0 0
      %277 = vperm.xlu0 %276, %v223
      %v278 = vpop.permute.xlu0 %277
      %281 = vset.pattern.permute.xlu0 0
      %282 = vperm.xlu0 %281, %v224
      %v283 = vpop.permute.xlu0 %282
      %286 = vset.pattern.permute.xlu0 0
      %287 = vperm.xlu0 %286, %v225
      %v288 = vpop.permute.xlu0 %287
      %291 = vset.pattern.permute.xlu0 0
      %292 = vperm.xlu0 %291, %v226
      %v293 = vpop.permute.xlu0 %292
      %296 = vset.pattern.permute.xlu0 0
      %297 = vperm.xlu0 %296, %v227
      %v298 = vpop.permute.xlu0 %297
      %301 = vset.pattern.permute.xlu0 0
      %302 = vperm.xlu0 %301, %v228
      %v303 = vpop.permute.xlu0 %302
      %306 = vset.pattern.permute.xlu0 0
      %307 = vperm.xlu0 %306, %v229
      %v308 = vpop.permute.xlu0 %307
      %311 = vset.pattern.permute.xlu0 0
      %312 = vperm.xlu0 %311, %v230
      %v313 = vpop.permute.xlu0 %312
      %316 = vset.pattern.permute.xlu0 0
      %317 = vperm.xlu0 %316, %v231
      %v318 = vpop.permute.xlu0 %317
      %321 = vset.pattern.permute.xlu0 0
      %322 = vperm.xlu0 %321, %v232
      %v323 = vpop.permute.xlu0 %322
      %326 = vset.pattern.permute.xlu0 0
      %327 = vperm.xlu0 %326, %v233
      %v328 = vpop.permute.xlu0 %327
      %v330 = vmul.f32 %v210, %v253
      %v331 = vmul.f32 %v211, %v253
      %v332 = vmul.f32 %v212, %v258
      %v333 = vmul.f32 %v213, %v258
      %v334 = vmul.f32 %v214, %v263
      %v335 = vmul.f32 %v215, %v263
      %v336 = vmul.f32 %v216, %v268
      %v337 = vmul.f32 %v217, %v268
      %v338 = vmul.f32 %v210, %v273
      %v339 = vmul.f32 %v211, %v273
      %v340 = vmul.f32 %v212, %v278
      %v341 = vmul.f32 %v213, %v278
      %v342 = vmul.f32 %v214, %v283
      %v343 = vmul.f32 %v215, %v283
      %v344 = vmul.f32 %v216, %v288
      %v345 = vmul.f32 %v217, %v288
      %v346 = vmul.f32 %v210, %v293
      %v347 = vmul.f32 %v211, %v293
      %v348 = vmul.f32 %v212, %v298
      %v349 = vmul.f32 %v213, %v298
      %v350 = vmul.f32 %v214, %v303
      %v351 = vmul.f32 %v215, %v303
      %v352 = vmul.f32 %v216, %v308
      %v353 = vmul.f32 %v217, %v308
      %v354 = vmul.f32 %v210, %v313
      %v355 = vmul.f32 %v211, %v313
      %v356 = vmul.f32 %v212, %v318
      %v357 = vmul.f32 %v213, %v318
      %v358 = vmul.f32 %v214, %v323
      %v359 = vmul.f32 %v215, %v323
      %v360 = vmul.f32 %v216, %v328
      %v361 = vmul.f32 %v217, %v328
      %363 = vset.pattern.permute.xlu0 0
      %364 = vperm.xlu0 %363, %v234
      %v365 = vpop.permute.xlu0 %364
      %368 = vset.pattern.permute.xlu0 0
      %369 = vperm.xlu0 %368, %v235
      %v370 = vpop.permute.xlu0 %369
      %373 = vset.pattern.permute.xlu0 0
      %374 = vperm.xlu0 %373, %v236
      %v375 = vpop.permute.xlu0 %374
      %378 = vset.pattern.permute.xlu0 0
      %379 = vperm.xlu0 %378, %v237
      %v380 = vpop.permute.xlu0 %379
      %383 = vset.pattern.permute.xlu0 0
      %384 = vperm.xlu0 %383, %v238
      %v385 = vpop.permute.xlu0 %384
      %388 = vset.pattern.permute.xlu0 0
      %389 = vperm.xlu0 %388, %v239
      %v390 = vpop.permute.xlu0 %389
      %393 = vset.pattern.permute.xlu0 0
      %394 = vperm.xlu0 %393, %v240
      %v395 = vpop.permute.xlu0 %394
      %398 = vset.pattern.permute.xlu0 0
      %399 = vperm.xlu0 %398, %v241
      %v400 = vpop.permute.xlu0 %399
      %403 = vset.pattern.permute.xlu0 0
      %404 = vperm.xlu0 %403, %v242
      %v405 = vpop.permute.xlu0 %404
      %408 = vset.pattern.permute.xlu0 0
      %409 = vperm.xlu0 %408, %v243
      %v410 = vpop.permute.xlu0 %409
      %413 = vset.pattern.permute.xlu0 0
      %414 = vperm.xlu0 %413, %v244
      %v415 = vpop.permute.xlu0 %414
      %418 = vset.pattern.permute.xlu0 0
      %419 = vperm.xlu0 %418, %v245
      %v420 = vpop.permute.xlu0 %419
      %423 = vset.pattern.permute.xlu0 0
      %424 = vperm.xlu0 %423, %v246
      %v425 = vpop.permute.xlu0 %424
      %428 = vset.pattern.permute.xlu0 0
      %429 = vperm.xlu0 %428, %v247
      %v430 = vpop.permute.xlu0 %429
      %433 = vset.pattern.permute.xlu0 0
      %434 = vperm.xlu0 %433, %v248
      %v435 = vpop.permute.xlu0 %434
      %438 = vset.pattern.permute.xlu0 0
      %439 = vperm.xlu0 %438, %v249
      %v440 = vpop.permute.xlu0 %439
      %v442 = vsub.f32 %v330, %v365
      %v443 = vsub.f32 %v331, %v365
      %v444 = vsub.f32 %v332, %v370
      %v445 = vsub.f32 %v333, %v370
      %v446 = vsub.f32 %v334, %v375
      %v447 = vsub.f32 %v335, %v375
      %v448 = vsub.f32 %v336, %v380
      %v449 = vsub.f32 %v337, %v380
      %v450 = vsub.f32 %v338, %v385
      %v451 = vsub.f32 %v339, %v385
      %v452 = vsub.f32 %v340, %v390
      %v453 = vsub.f32 %v341, %v390
      %v454 = vsub.f32 %v342, %v395
      %v455 = vsub.f32 %v343, %v395
      %v456 = vsub.f32 %v344, %v400
      %v457 = vsub.f32 %v345, %v400
      %v458 = vsub.f32 %v346, %v405
      %v459 = vsub.f32 %v347, %v405
      %v460 = vsub.f32 %v348, %v410
      %v461 = vsub.f32 %v349, %v410
      %v462 = vsub.f32 %v350, %v415
      %v463 = vsub.f32 %v351, %v415
      %v464 = vsub.f32 %v352, %v420
      %v465 = vsub.f32 %v353, %v420
      %v466 = vsub.f32 %v354, %v425
      %v467 = vsub.f32 %v355, %v425
      %v468 = vsub.f32 %v356, %v430
      %v469 = vsub.f32 %v357, %v430
      %v470 = vsub.f32 %v358, %v435
      %v471 = vsub.f32 %v359, %v435
      %v472 = vsub.f32 %v360, %v440
      %v473 = vsub.f32 %v361, %v440
      %v474 = vmul.f32 %v442, 10.0
      %v475 = vmul.f32 %v443, 10.0
      %v476 = vmul.f32 %v444, 10.0
      %v477 = vmul.f32 %v445, 10.0
      %v478 = vmul.f32 %v446, 10.0
      %v479 = vmul.f32 %v447, 10.0
      %v480 = vmul.f32 %v448, 10.0
      %v481 = vmul.f32 %v449, 10.0
      %v482 = vmul.f32 %v450, 10.0
      %v483 = vmul.f32 %v451, 10.0
      %v484 = vmul.f32 %v452, 10.0
      %v485 = vmul.f32 %v453, 10.0
      %v486 = vmul.f32 %v454, 10.0
      %v487 = vmul.f32 %v455, 10.0
      %v488 = vmul.f32 %v456, 10.0
      %v489 = vmul.f32 %v457, 10.0
      %v490 = vmul.f32 %v458, 10.0
      %v491 = vmul.f32 %v459, 10.0
      %v492 = vmul.f32 %v460, 10.0
      %v493 = vmul.f32 %v461, 10.0
      %v494 = vmul.f32 %v462, 10.0
      %v495 = vmul.f32 %v463, 10.0
      %v496 = vmul.f32 %v464, 10.0
      %v497 = vmul.f32 %v465, 10.0
      %v498 = vmul.f32 %v466, 10.0
      %v499 = vmul.f32 %v467, 10.0
      %v500 = vmul.f32 %v468, 10.0
      %v501 = vmul.f32 %v469, 10.0
      %v502 = vmul.f32 %v470, 10.0
      %v503 = vmul.f32 %v471, 10.0
      %v504 = vmul.f32 %v472, 10.0
      %v505 = vmul.f32 %v473, 10.0
      %v506 = vand.u32 2147483647, %v474
      %v507 = vand.u32 2147483647, %v475
      %v508 = vand.u32 2147483647, %v476
      %v509 = vand.u32 2147483647, %v477
      %v510 = vand.u32 2147483647, %v478
      %v511 = vand.u32 2147483647, %v479
      %v512 = vand.u32 2147483647, %v480
      %v513 = vand.u32 2147483647, %v481
      %v514 = vand.u32 2147483647, %v482
      %v515 = vand.u32 2147483647, %v483
      %v516 = vand.u32 2147483647, %v484
      %v517 = vand.u32 2147483647, %v485
      %v518 = vand.u32 2147483647, %v486
      %v519 = vand.u32 2147483647, %v487
      %v520 = vand.u32 2147483647, %v488
      %v521 = vand.u32 2147483647, %v489
      %v522 = vand.u32 2147483647, %v490
      %v523 = vand.u32 2147483647, %v491
      %v524 = vand.u32 2147483647, %v492
      %v525 = vand.u32 2147483647, %v493
      %v526 = vand.u32 2147483647, %v494
      %v527 = vand.u32 2147483647, %v495
      %v528 = vand.u32 2147483647, %v496
      %v529 = vand.u32 2147483647, %v497
      %v530 = vand.u32 2147483647, %v498
      %v531 = vand.u32 2147483647, %v499
      %v532 = vand.u32 2147483647, %v500
      %v533 = vand.u32 2147483647, %v501
      %v534 = vand.u32 2147483647, %v502
      %v535 = vand.u32 2147483647, %v503
      %v536 = vand.u32 2147483647, %v504
      %v537 = vand.u32 2147483647, %v505
      %vm538 = vcmp.lt.f32.partialorder %v474, 0.0
      %vm539 = vcmp.lt.f32.partialorder %v475, 0.0
      %vm540 = vcmp.lt.f32.partialorder %v476, 0.0
      %vm541 = vcmp.lt.f32.partialorder %v477, 0.0
      %vm542 = vcmp.lt.f32.partialorder %v478, 0.0
      %vm543 = vcmp.lt.f32.partialorder %v479, 0.0
      %vm544 = vcmp.lt.f32.partialorder %v480, 0.0
      %vm545 = vcmp.lt.f32.partialorder %v481, 0.0
      %vm546 = vcmp.lt.f32.partialorder %v482, 0.0
      %vm547 = vcmp.lt.f32.partialorder %v483, 0.0
      %vm548 = vcmp.lt.f32.partialorder %v484, 0.0
      %vm549 = vcmp.lt.f32.partialorder %v485, 0.0
      %vm550 = vcmp.lt.f32.partialorder %v486, 0.0
      %vm551 = vcmp.lt.f32.partialorder %v487, 0.0
      %vm552 = vcmp.lt.f32.partialorder %v488, 0.0
      %vm553 = vcmp.lt.f32.partialorder %v489, 0.0
      %vm554 = vcmp.lt.f32.partialorder %v490, 0.0
      %vm555 = vcmp.lt.f32.partialorder %v491, 0.0
      %vm556 = vcmp.lt.f32.partialorder %v492, 0.0
      %vm557 = vcmp.lt.f32.partialorder %v493, 0.0
      %vm558 = vcmp.lt.f32.partialorder %v494, 0.0
      %vm559 = vcmp.lt.f32.partialorder %v495, 0.0
      %vm560 = vcmp.lt.f32.partialorder %v496, 0.0
      %vm561 = vcmp.lt.f32.partialorder %v497, 0.0
      %vm562 = vcmp.lt.f32.partialorder %v498, 0.0
      %vm563 = vcmp.lt.f32.partialorder %v499, 0.0
      %vm564 = vcmp.lt.f32.partialorder %v500, 0.0
      %vm565 = vcmp.lt.f32.partialorder %v501, 0.0
      %vm566 = vcmp.lt.f32.partialorder %v502, 0.0
      %vm567 = vcmp.lt.f32.partialorder %v503, 0.0
      %vm568 = vcmp.lt.f32.partialorder %v504, 0.0
      %vm569 = vcmp.lt.f32.partialorder %v505, 0.0
      %v570 = vsel %vm538, -1.0, 1.0
      %v571 = vsel %vm539, -1.0, 1.0
      %v572 = vsel %vm540, -1.0, 1.0
      %v573 = vsel %vm541, -1.0, 1.0
      %v574 = vsel %vm542, -1.0, 1.0
      %v575 = vsel %vm543, -1.0, 1.0
      %v576 = vsel %vm544, -1.0, 1.0
      %v577 = vsel %vm545, -1.0, 1.0
      %v578 = vsel %vm546, -1.0, 1.0
      %v579 = vsel %vm547, -1.0, 1.0
      %v580 = vsel %vm548, -1.0, 1.0
      %v581 = vsel %vm549, -1.0, 1.0
      %v582 = vsel %vm550, -1.0, 1.0
      %v583 = vsel %vm551, -1.0, 1.0
      %v584 = vsel %vm552, -1.0, 1.0
      %v585 = vsel %vm553, -1.0, 1.0
      %v586 = vsel %vm554, -1.0, 1.0
      %v587 = vsel %vm555, -1.0, 1.0
      %v588 = vsel %vm556, -1.0, 1.0
      %v589 = vsel %vm557, -1.0, 1.0
      %v590 = vsel %vm558, -1.0, 1.0
      %v591 = vsel %vm559, -1.0, 1.0
      %v592 = vsel %vm560, -1.0, 1.0
      %v593 = vsel %vm561, -1.0, 1.0
      %v594 = vsel %vm562, -1.0, 1.0
      %v595 = vsel %vm563, -1.0, 1.0
      %v596 = vsel %vm564, -1.0, 1.0
      %v597 = vsel %vm565, -1.0, 1.0
      %v598 = vsel %vm566, -1.0, 1.0
      %v599 = vsel %vm567, -1.0, 1.0
      %v600 = vsel %vm568, -1.0, 1.0
      %v601 = vsel %vm569, -1.0, 1.0
      %vm602 = vcmp.gt.f32.partialorder %v506, 2.4142137
      %vm603 = vcmp.gt.f32.partialorder %v507, 2.4142137
      %vm604 = vcmp.gt.f32.partialorder %v508, 2.4142137
      %vm605 = vcmp.gt.f32.partialorder %v509, 2.4142137
      %vm606 = vcmp.gt.f32.partialorder %v510, 2.4142137
      %vm607 = vcmp.gt.f32.partialorder %v511, 2.4142137
      %vm608 = vcmp.gt.f32.partialorder %v512, 2.4142137
      %vm609 = vcmp.gt.f32.partialorder %v513, 2.4142137
      %vm610 = vcmp.gt.f32.partialorder %v514, 2.4142137
      %vm611 = vcmp.gt.f32.partialorder %v515, 2.4142137
      %vm612 = vcmp.gt.f32.partialorder %v516, 2.4142137
      %vm613 = vcmp.gt.f32.partialorder %v517, 2.4142137
      %vm614 = vcmp.gt.f32.partialorder %v518, 2.4142137
      %vm615 = vcmp.gt.f32.partialorder %v519, 2.4142137
      %vm616 = vcmp.gt.f32.partialorder %v520, 2.4142137
      %vm617 = vcmp.gt.f32.partialorder %v521, 2.4142137
      %vm618 = vcmp.gt.f32.partialorder %v522, 2.4142137
      %vm619 = vcmp.gt.f32.partialorder %v523, 2.4142137
      %vm620 = vcmp.gt.f32.partialorder %v524, 2.4142137
      %vm621 = vcmp.gt.f32.partialorder %v525, 2.4142137
      %vm622 = vcmp.gt.f32.partialorder %v526, 2.4142137
      %vm623 = vcmp.gt.f32.partialorder %v527, 2.4142137
      %vm624 = vcmp.gt.f32.partialorder %v528, 2.4142137
      %vm625 = vcmp.gt.f32.partialorder %v529, 2.4142137
      %vm626 = vcmp.gt.f32.partialorder %v530, 2.4142137
      %vm627 = vcmp.gt.f32.partialorder %v531, 2.4142137
      %vm628 = vcmp.gt.f32.partialorder %v532, 2.4142137
      %vm629 = vcmp.gt.f32.partialorder %v533, 2.4142137
      %vm630 = vcmp.gt.f32.partialorder %v534, 2.4142137
      %vm631 = vcmp.gt.f32.partialorder %v535, 2.4142137
      %vm632 = vcmp.gt.f32.partialorder %v536, 2.4142137
      %vm633 = vcmp.gt.f32.partialorder %v537, 2.4142137
      %vm634 = vcmp.gt.f32.partialorder %v506, 0.41421357
      %vm635 = vcmp.gt.f32.partialorder %v507, 0.41421357
      %vm636 = vcmp.gt.f32.partialorder %v508, 0.41421357
      %vm637 = vcmp.gt.f32.partialorder %v509, 0.41421357
      %vm638 = vcmp.gt.f32.partialorder %v510, 0.41421357
      %vm639 = vcmp.gt.f32.partialorder %v511, 0.41421357
      %vm640 = vcmp.gt.f32.partialorder %v512, 0.41421357
      %vm641 = vcmp.gt.f32.partialorder %v513, 0.41421357
      %vm642 = vcmp.gt.f32.partialorder %v514, 0.41421357
      %vm643 = vcmp.gt.f32.partialorder %v515, 0.41421357
      %vm644 = vcmp.gt.f32.partialorder %v516, 0.41421357
      %vm645 = vcmp.gt.f32.partialorder %v517, 0.41421357
      %vm646 = vcmp.gt.f32.partialorder %v518, 0.41421357
      %vm647 = vcmp.gt.f32.partialorder %v519, 0.41421357
      %vm648 = vcmp.gt.f32.partialorder %v520, 0.41421357
      %vm649 = vcmp.gt.f32.partialorder %v521, 0.41421357
      %vm650 = vcmp.gt.f32.partialorder %v522, 0.41421357
      %vm651 = vcmp.gt.f32.partialorder %v523, 0.41421357
      %vm652 = vcmp.gt.f32.partialorder %v524, 0.41421357
      %vm653 = vcmp.gt.f32.partialorder %v525, 0.41421357
      %vm654 = vcmp.gt.f32.partialorder %v526, 0.41421357
      %vm655 = vcmp.gt.f32.partialorder %v527, 0.41421357
      %vm656 = vcmp.gt.f32.partialorder %v528, 0.41421357
      %vm657 = vcmp.gt.f32.partialorder %v529, 0.41421357
      %vm658 = vcmp.gt.f32.partialorder %v530, 0.41421357
      %vm659 = vcmp.gt.f32.partialorder %v531, 0.41421357
      %vm660 = vcmp.gt.f32.partialorder %v532, 0.41421357
      %vm661 = vcmp.gt.f32.partialorder %v533, 0.41421357
      %vm662 = vcmp.gt.f32.partialorder %v534, 0.41421357
      %vm663 = vcmp.gt.f32.partialorder %v535, 0.41421357
      %vm664 = vcmp.gt.f32.partialorder %v536, 0.41421357
      %vm665 = vcmp.gt.f32.partialorder %v537, 0.41421357
      %vm666 = vmxor %vm602, 1
      %vm667 = vmxor %vm603, 1
      %vm668 = vmxor %vm604, 1
      %vm669 = vmxor %vm605, 1
      %vm670 = vmxor %vm606, 1
      %vm671 = vmxor %vm607, 1
      %vm672 = vmxor %vm608, 1
      %vm673 = vmxor %vm609, 1
      %vm674 = vmxor %vm610, 1
      %vm675 = vmxor %vm611, 1
      %vm676 = vmxor %vm612, 1
      %vm677 = vmxor %vm613, 1
      %vm678 = vmxor %vm614, 1
      %vm679 = vmxor %vm615, 1
      %vm680 = vmxor %vm616, 1
      %vm681 = vmxor %vm617, 1
      %vm682 = vmxor %vm618, 1
      %vm683 = vmxor %vm619, 1
      %vm684 = vmxor %vm620, 1
      %vm685 = vmxor %vm621, 1
      %vm686 = vmxor %vm622, 1
      %vm687 = vmxor %vm623, 1
      %vm688 = vmxor %vm624, 1
      %vm689 = vmxor %vm625, 1
      %vm690 = vmxor %vm626, 1
      %vm691 = vmxor %vm627, 1
      %vm692 = vmxor %vm628, 1
      %vm693 = vmxor %vm629, 1
      %vm694 = vmxor %vm630, 1
      %vm695 = vmxor %vm631, 1
      %vm696 = vmxor %vm632, 1
      %vm697 = vmxor %vm633, 1
      %vm698 = vmand %vm634, %vm666
      %vm699 = vmand %vm635, %vm667
      %vm700 = vmand %vm636, %vm668
      %vm701 = vmand %vm637, %vm669
      %vm702 = vmand %vm638, %vm670
      %vm703 = vmand %vm639, %vm671
      %vm704 = vmand %vm640, %vm672
      %vm705 = vmand %vm641, %vm673
      %vm706 = vmand %vm642, %vm674
      %vm707 = vmand %vm643, %vm675
      %vm708 = vmand %vm644, %vm676
      %vm709 = vmand %vm645, %vm677
      %vm710 = vmand %vm646, %vm678
      %vm711 = vmand %vm647, %vm679
      %vm712 = vmand %vm648, %vm680
      %vm713 = vmand %vm649, %vm681
      %vm714 = vmand %vm650, %vm682
      %vm715 = vmand %vm651, %vm683
      %vm716 = vmand %vm652, %vm684
      %vm717 = vmand %vm653, %vm685
      %vm718 = vmand %vm654, %vm686
      %vm719 = vmand %vm655, %vm687
      %vm720 = vmand %vm656, %vm688
      %vm721 = vmand %vm657, %vm689
      %vm722 = vmand %vm658, %vm690
      %vm723 = vmand %vm659, %vm691
      %vm724 = vmand %vm660, %vm692
      %vm725 = vmand %vm661, %vm693
      %vm726 = vmand %vm662, %vm694
      %vm727 = vmand %vm663, %vm695
      %vm728 = vmand %vm664, %vm696
      %vm729 = vmand %vm665, %vm697
      %v730 = vmax.f32 %v506, 1e-30
      %v731 = vmax.f32 %v507, 1e-30
      %v732 = vmax.f32 %v508, 1e-30
      %v733 = vmax.f32 %v509, 1e-30
      %v734 = vmax.f32 %v510, 1e-30
      %v735 = vmax.f32 %v511, 1e-30
      %v736 = vmax.f32 %v512, 1e-30
      %v737 = vmax.f32 %v513, 1e-30
      %v738 = vmax.f32 %v514, 1e-30
      %v739 = vmax.f32 %v515, 1e-30
      %v740 = vmax.f32 %v516, 1e-30
      %v741 = vmax.f32 %v517, 1e-30
      %v742 = vmax.f32 %v518, 1e-30
      %v743 = vmax.f32 %v519, 1e-30
      %v744 = vmax.f32 %v520, 1e-30
      %v745 = vmax.f32 %v521, 1e-30
      %v746 = vmax.f32 %v522, 1e-30
      %v747 = vmax.f32 %v523, 1e-30
      %v748 = vmax.f32 %v524, 1e-30
      %v749 = vmax.f32 %v525, 1e-30
      %v750 = vmax.f32 %v526, 1e-30
      %v751 = vmax.f32 %v527, 1e-30
      %v752 = vmax.f32 %v528, 1e-30
      %v753 = vmax.f32 %v529, 1e-30
      %v754 = vmax.f32 %v530, 1e-30
      %v755 = vmax.f32 %v531, 1e-30
      %v756 = vmax.f32 %v532, 1e-30
      %v757 = vmax.f32 %v533, 1e-30
      %v758 = vmax.f32 %v534, 1e-30
      %v759 = vmax.f32 %v535, 1e-30
      %v760 = vmax.f32 %v536, 1e-30
      %v761 = vmax.f32 %v537, 1e-30
      %v762 = vrcp.pop %v730
      %v763 = vmul.f32 %v730, %v762
      %v764 = vsub.f32 1.0, %v763
      %v765 = vmul.f32 %v762, %v764
      %v766 = vadd.f32 %v762, %v765
      %vm767 = vweird.f32 %v730
      %vm768 = vweird.f32 %v762
      %vm769 = vmor %vm767, %vm768
      %v770 = vsel %vm769, %v762, %v766
      %v771 = vand.u32 2147483647, %v730
      %vm772 = vcmp.eq.f32.partialorder %v771, 8.507059e+37
      %v773 = vand.u32 %v730, 2147483648
      %v774 = vor.u32 1.1754944e-38, %v773
      %v775 = vsel %vm772, %v774, %v770
      %v776 = vmul.f32 -1.0, %v775
      %v777 = vrcp.pop %v731
      %v778 = vmul.f32 %v731, %v777
      %v779 = vsub.f32 1.0, %v778
      %v780 = vmul.f32 %v777, %v779
      %v781 = vadd.f32 %v777, %v780
      %vm782 = vweird.f32 %v731
      %vm783 = vweird.f32 %v777
      %vm784 = vmor %vm782, %vm783
      %v785 = vsel %vm784, %v777, %v781
      %v786 = vand.u32 2147483647, %v731
      %vm787 = vcmp.eq.f32.partialorder %v786, 8.507059e+37
      %v788 = vand.u32 %v731, 2147483648
      %v789 = vor.u32 1.1754944e-38, %v788
      %v790 = vsel %vm787, %v789, %v785
      %v791 = vmul.f32 -1.0, %v790
      %v792 = vrcp.pop %v732
      %v793 = vmul.f32 %v732, %v792
      %v794 = vsub.f32 1.0, %v793
      %v795 = vmul.f32 %v792, %v794
      %v796 = vadd.f32 %v792, %v795
      %vm797 = vweird.f32 %v732
      %vm798 = vweird.f32 %v792
      %vm799 = vmor %vm797, %vm798
      %v800 = vsel %vm799, %v792, %v796
      %v801 = vand.u32 2147483647, %v732
      %vm802 = vcmp.eq.f32.partialorder %v801, 8.507059e+37
      %v803 = vand.u32 %v732, 2147483648
      %v804 = vor.u32 1.1754944e-38, %v803
      %v805 = vsel %vm802, %v804, %v800
      %v806 = vmul.f32 -1.0, %v805
      %v807 = vrcp.pop %v733
      %v808 = vmul.f32 %v733, %v807
      %v809 = vsub.f32 1.0, %v808
      %v810 = vmul.f32 %v807, %v809
      %v811 = vadd.f32 %v807, %v810
      %vm812 = vweird.f32 %v733
      %vm813 = vweird.f32 %v807
      %vm814 = vmor %vm812, %vm813
      %v815 = vsel %vm814, %v807, %v811
      %v816 = vand.u32 2147483647, %v733
      %vm817 = vcmp.eq.f32.partialorder %v816, 8.507059e+37
      %v818 = vand.u32 %v733, 2147483648
      %v819 = vor.u32 1.1754944e-38, %v818
      %v820 = vsel %vm817, %v819, %v815
      %v821 = vmul.f32 -1.0, %v820
      %v822 = vrcp.pop %v734
      %v823 = vmul.f32 %v734, %v822
      %v824 = vsub.f32 1.0, %v823
      %v825 = vmul.f32 %v822, %v824
      %v826 = vadd.f32 %v822, %v825
      %vm827 = vweird.f32 %v734
      %vm828 = vweird.f32 %v822
      %vm829 = vmor %vm827, %vm828
      %v830 = vsel %vm829, %v822, %v826
      %v831 = vand.u32 2147483647, %v734
      %vm832 = vcmp.eq.f32.partialorder %v831, 8.507059e+37
      %v833 = vand.u32 %v734, 2147483648
      %v834 = vor.u32 1.1754944e-38, %v833
      %v835 = vsel %vm832, %v834, %v830
      %v836 = vmul.f32 -1.0, %v835
      %v837 = vrcp.pop %v735
      %v838 = vmul.f32 %v735, %v837
      %v839 = vsub.f32 1.0, %v838
      %v840 = vmul.f32 %v837, %v839
      %v841 = vadd.f32 %v837, %v840
      %vm842 = vweird.f32 %v735
      %vm843 = vweird.f32 %v837
      %vm844 = vmor %vm842, %vm843
      %v845 = vsel %vm844, %v837, %v841
      %v846 = vand.u32 2147483647, %v735
      %vm847 = vcmp.eq.f32.partialorder %v846, 8.507059e+37
      %v848 = vand.u32 %v735, 2147483648
      %v849 = vor.u32 1.1754944e-38, %v848
      %v850 = vsel %vm847, %v849, %v845
      %v851 = vmul.f32 -1.0, %v850
      %v852 = vrcp.pop %v736
      %v853 = vmul.f32 %v736, %v852
      %v854 = vsub.f32 1.0, %v853
      %v855 = vmul.f32 %v852, %v854
      %v856 = vadd.f32 %v852, %v855
      %vm857 = vweird.f32 %v736
      %vm858 = vweird.f32 %v852
      %vm859 = vmor %vm857, %vm858
      %v860 = vsel %vm859, %v852, %v856
      %v861 = vand.u32 2147483647, %v736
      %vm862 = vcmp.eq.f32.partialorder %v861, 8.507059e+37
      %v863 = vand.u32 %v736, 2147483648
      %v864 = vor.u32 1.1754944e-38, %v863
      %v865 = vsel %vm862, %v864, %v860
      %v866 = vmul.f32 -1.0, %v865
      %v867 = vrcp.pop %v737
      %v868 = vmul.f32 %v737, %v867
      %v869 = vsub.f32 1.0, %v868
      %v870 = vmul.f32 %v867, %v869
      %v871 = vadd.f32 %v867, %v870
      %vm872 = vweird.f32 %v737
      %vm873 = vweird.f32 %v867
      %vm874 = vmor %vm872, %vm873
      %v875 = vsel %vm874, %v867, %v871
      %v876 = vand.u32 2147483647, %v737
      %vm877 = vcmp.eq.f32.partialorder %v876, 8.507059e+37
      %v878 = vand.u32 %v737, 2147483648
      %v879 = vor.u32 1.1754944e-38, %v878
      %v880 = vsel %vm877, %v879, %v875
      %v881 = vmul.f32 -1.0, %v880
      %v882 = vrcp.pop %v738
      %v883 = vmul.f32 %v738, %v882
      %v884 = vsub.f32 1.0, %v883
      %v885 = vmul.f32 %v882, %v884
      %v886 = vadd.f32 %v882, %v885
      %vm887 = vweird.f32 %v738
      %vm888 = vweird.f32 %v882
      %vm889 = vmor %vm887, %vm888
      %v890 = vsel %vm889, %v882, %v886
      %v891 = vand.u32 2147483647, %v738
      %vm892 = vcmp.eq.f32.partialorder %v891, 8.507059e+37
      %v893 = vand.u32 %v738, 2147483648
      %v894 = vor.u32 1.1754944e-38, %v893
      %v895 = vsel %vm892, %v894, %v890
      %v896 = vmul.f32 -1.0, %v895
      %v897 = vrcp.pop %v739
      %v898 = vmul.f32 %v739, %v897
      %v899 = vsub.f32 1.0, %v898
      %v900 = vmul.f32 %v897, %v899
      %v901 = vadd.f32 %v897, %v900
      %vm902 = vweird.f32 %v739
      %vm903 = vweird.f32 %v897
      %vm904 = vmor %vm902, %vm903
      %v905 = vsel %vm904, %v897, %v901
      %v906 = vand.u32 2147483647, %v739
      %vm907 = vcmp.eq.f32.partialorder %v906, 8.507059e+37
      %v908 = vand.u32 %v739, 2147483648
      %v909 = vor.u32 1.1754944e-38, %v908
      %v910 = vsel %vm907, %v909, %v905
      %v911 = vmul.f32 -1.0, %v910
      %v912 = vrcp.pop %v740
      %v913 = vmul.f32 %v740, %v912
      %v914 = vsub.f32 1.0, %v913
      %v915 = vmul.f32 %v912, %v914
      %v916 = vadd.f32 %v912, %v915
      %vm917 = vweird.f32 %v740
      %vm918 = vweird.f32 %v912
      %vm919 = vmor %vm917, %vm918
      %v920 = vsel %vm919, %v912, %v916
      %v921 = vand.u32 2147483647, %v740
      %vm922 = vcmp.eq.f32.partialorder %v921, 8.507059e+37
      %v923 = vand.u32 %v740, 2147483648
      %v924 = vor.u32 1.1754944e-38, %v923
      %v925 = vsel %vm922, %v924, %v920
      %v926 = vmul.f32 -1.0, %v925
      %v927 = vrcp.pop %v741
      %v928 = vmul.f32 %v741, %v927
      %v929 = vsub.f32 1.0, %v928
      %v930 = vmul.f32 %v927, %v929
      %v931 = vadd.f32 %v927, %v930
      %vm932 = vweird.f32 %v741
      %vm933 = vweird.f32 %v927
      %vm934 = vmor %vm932, %vm933
      %v935 = vsel %vm934, %v927, %v931
      %v936 = vand.u32 2147483647, %v741
      %vm937 = vcmp.eq.f32.partialorder %v936, 8.507059e+37
      %v938 = vand.u32 %v741, 2147483648
      %v939 = vor.u32 1.1754944e-38, %v938
      %v940 = vsel %vm937, %v939, %v935
      %v941 = vmul.f32 -1.0, %v940
      %v942 = vrcp.pop %v742
      %v943 = vmul.f32 %v742, %v942
      %v944 = vsub.f32 1.0, %v943
      %v945 = vmul.f32 %v942, %v944
      %v946 = vadd.f32 %v942, %v945
      %vm947 = vweird.f32 %v742
      %vm948 = vweird.f32 %v942
      %vm949 = vmor %vm947, %vm948
      %v950 = vsel %vm949, %v942, %v946
      %v951 = vand.u32 2147483647, %v742
      %vm952 = vcmp.eq.f32.partialorder %v951, 8.507059e+37
      %v953 = vand.u32 %v742, 2147483648
      %v954 = vor.u32 1.1754944e-38, %v953
      %v955 = vsel %vm952, %v954, %v950
      %v956 = vmul.f32 -1.0, %v955
      %v957 = vrcp.pop %v743
      %v958 = vmul.f32 %v743, %v957
      %v959 = vsub.f32 1.0, %v958
      %v960 = vmul.f32 %v957, %v959
      %v961 = vadd.f32 %v957, %v960
      %vm962 = vweird.f32 %v743
      %vm963 = vweird.f32 %v957
      %vm964 = vmor %vm962, %vm963
      %v965 = vsel %vm964, %v957, %v961
      %v966 = vand.u32 2147483647, %v743
      %vm967 = vcmp.eq.f32.partialorder %v966, 8.507059e+37
      %v968 = vand.u32 %v743, 2147483648
      %v969 = vor.u32 1.1754944e-38, %v968
      %v970 = vsel %vm967, %v969, %v965
      %v971 = vmul.f32 -1.0, %v970
      %v972 = vrcp.pop %v744
      %v973 = vmul.f32 %v744, %v972
      %v974 = vsub.f32 1.0, %v973
      %v975 = vmul.f32 %v972, %v974
      %v976 = vadd.f32 %v972, %v975
      %vm977 = vweird.f32 %v744
      %vm978 = vweird.f32 %v972
      %vm979 = vmor %vm977, %vm978
      %v980 = vsel %vm979, %v972, %v976
      %v981 = vand.u32 2147483647, %v744
      %vm982 = vcmp.eq.f32.partialorder %v981, 8.507059e+37
      %v983 = vand.u32 %v744, 2147483648
      %v984 = vor.u32 1.1754944e-38, %v983
      %v985 = vsel %vm982, %v984, %v980
      %v986 = vmul.f32 -1.0, %v985
      %v987 = vrcp.pop %v745
      %v988 = vmul.f32 %v745, %v987
      %v989 = vsub.f32 1.0, %v988
      %v990 = vmul.f32 %v987, %v989
      %v991 = vadd.f32 %v987, %v990
      %vm992 = vweird.f32 %v745
      %vm993 = vweird.f32 %v987
      %vm994 = vmor %vm992, %vm993
      %v995 = vsel %vm994, %v987, %v991
      %v996 = vand.u32 2147483647, %v745
      %vm997 = vcmp.eq.f32.partialorder %v996, 8.507059e+37
      %v998 = vand.u32 %v745, 2147483648
      %v999 = vor.u32 1.1754944e-38, %v998
      %v1000 = vsel %vm997, %v999, %v995
      %v1001 = vmul.f32 -1.0, %v1000
      %v1002 = vrcp.pop %v746
      %v1003 = vmul.f32 %v746, %v1002
      %v1004 = vsub.f32 1.0, %v1003
      %v1005 = vmul.f32 %v1002, %v1004
      %v1006 = vadd.f32 %v1002, %v1005
      %vm1007 = vweird.f32 %v746
      %vm1008 = vweird.f32 %v1002
      %vm1009 = vmor %vm1007, %vm1008
      %v1010 = vsel %vm1009, %v1002, %v1006
      %v1011 = vand.u32 2147483647, %v746
      %vm1012 = vcmp.eq.f32.partialorder %v1011, 8.507059e+37
      %v1013 = vand.u32 %v746, 2147483648
      %v1014 = vor.u32 1.1754944e-38, %v1013
      %v1015 = vsel %vm1012, %v1014, %v1010
      %v1016 = vmul.f32 -1.0, %v1015
      %v1017 = vrcp.pop %v747
      %v1018 = vmul.f32 %v747, %v1017
      %v1019 = vsub.f32 1.0, %v1018
      %v1020 = vmul.f32 %v1017, %v1019
      %v1021 = vadd.f32 %v1017, %v1020
      %vm1022 = vweird.f32 %v747
      %vm1023 = vweird.f32 %v1017
      %vm1024 = vmor %vm1022, %vm1023
      %v1025 = vsel %vm1024, %v1017, %v1021
      %v1026 = vand.u32 2147483647, %v747
      %vm1027 = vcmp.eq.f32.partialorder %v1026, 8.507059e+37
      %v1028 = vand.u32 %v747, 2147483648
      %v1029 = vor.u32 1.1754944e-38, %v1028
      %v1030 = vsel %vm1027, %v1029, %v1025
      %v1031 = vmul.f32 -1.0, %v1030
      %v1032 = vrcp.pop %v748
      %v1033 = vmul.f32 %v748, %v1032
      %v1034 = vsub.f32 1.0, %v1033
      %v1035 = vmul.f32 %v1032, %v1034
      %v1036 = vadd.f32 %v1032, %v1035
      %vm1037 = vweird.f32 %v748
      %vm1038 = vweird.f32 %v1032
      %vm1039 = vmor %vm1037, %vm1038
      %v1040 = vsel %vm1039, %v1032, %v1036
      %v1041 = vand.u32 2147483647, %v748
      %vm1042 = vcmp.eq.f32.partialorder %v1041, 8.507059e+37
      %v1043 = vand.u32 %v748, 2147483648
      %v1044 = vor.u32 1.1754944e-38, %v1043
      %v1045 = vsel %vm1042, %v1044, %v1040
      %v1046 = vmul.f32 -1.0, %v1045
      %v1047 = vrcp.pop %v749
      %v1048 = vmul.f32 %v749, %v1047
      %v1049 = vsub.f32 1.0, %v1048
      %v1050 = vmul.f32 %v1047, %v1049
      %v1051 = vadd.f32 %v1047, %v1050
      %vm1052 = vweird.f32 %v749
      %vm1053 = vweird.f32 %v1047
      %vm1054 = vmor %vm1052, %vm1053
      %v1055 = vsel %vm1054, %v1047, %v1051
      %v1056 = vand.u32 2147483647, %v749
      %vm1057 = vcmp.eq.f32.partialorder %v1056, 8.507059e+37
      %v1058 = vand.u32 %v749, 2147483648
      %v1059 = vor.u32 1.1754944e-38, %v1058
      %v1060 = vsel %vm1057, %v1059, %v1055
      %v1061 = vmul.f32 -1.0, %v1060
      %v1062 = vrcp.pop %v750
      %v1063 = vmul.f32 %v750, %v1062
      %v1064 = vsub.f32 1.0, %v1063
      %v1065 = vmul.f32 %v1062, %v1064
      %v1066 = vadd.f32 %v1062, %v1065
      %vm1067 = vweird.f32 %v750
      %vm1068 = vweird.f32 %v1062
      %vm1069 = vmor %vm1067, %vm1068
      %v1070 = vsel %vm1069, %v1062, %v1066
      %v1071 = vand.u32 2147483647, %v750
      %vm1072 = vcmp.eq.f32.partialorder %v1071, 8.507059e+37
      %v1073 = vand.u32 %v750, 2147483648
      %v1074 = vor.u32 1.1754944e-38, %v1073
      %v1075 = vsel %vm1072, %v1074, %v1070
      %v1076 = vmul.f32 -1.0, %v1075
      %v1077 = vrcp.pop %v751
      %v1078 = vmul.f32 %v751, %v1077
      %v1079 = vsub.f32 1.0, %v1078
      %v1080 = vmul.f32 %v1077, %v1079
      %v1081 = vadd.f32 %v1077, %v1080
      %vm1082 = vweird.f32 %v751
      %vm1083 = vweird.f32 %v1077
      %vm1084 = vmor %vm1082, %vm1083
      %v1085 = vsel %vm1084, %v1077, %v1081
      %v1086 = vand.u32 2147483647, %v751
      %vm1087 = vcmp.eq.f32.partialorder %v1086, 8.507059e+37
      %v1088 = vand.u32 %v751, 2147483648
      %v1089 = vor.u32 1.1754944e-38, %v1088
      %v1090 = vsel %vm1087, %v1089, %v1085
      %v1091 = vmul.f32 -1.0, %v1090
      %v1092 = vrcp.pop %v752
      %v1093 = vmul.f32 %v752, %v1092
      %v1094 = vsub.f32 1.0, %v1093
      %v1095 = vmul.f32 %v1092, %v1094
      %v1096 = vadd.f32 %v1092, %v1095
      %vm1097 = vweird.f32 %v752
      %vm1098 = vweird.f32 %v1092
      %vm1099 = vmor %vm1097, %vm1098
      %v1100 = vsel %vm1099, %v1092, %v1096
      %v1101 = vand.u32 2147483647, %v752
      %vm1102 = vcmp.eq.f32.partialorder %v1101, 8.507059e+37
      %v1103 = vand.u32 %v752, 2147483648
      %v1104 = vor.u32 1.1754944e-38, %v1103
      %v1105 = vsel %vm1102, %v1104, %v1100
      %v1106 = vmul.f32 -1.0, %v1105
      %v1107 = vrcp.pop %v753
      %v1108 = vmul.f32 %v753, %v1107
      %v1109 = vsub.f32 1.0, %v1108
      %v1110 = vmul.f32 %v1107, %v1109
      %v1111 = vadd.f32 %v1107, %v1110
      %vm1112 = vweird.f32 %v753
      %vm1113 = vweird.f32 %v1107
      %vm1114 = vmor %vm1112, %vm1113
      %v1115 = vsel %vm1114, %v1107, %v1111
      %v1116 = vand.u32 2147483647, %v753
      %vm1117 = vcmp.eq.f32.partialorder %v1116, 8.507059e+37
      %v1118 = vand.u32 %v753, 2147483648
      %v1119 = vor.u32 1.1754944e-38, %v1118
      %v1120 = vsel %vm1117, %v1119, %v1115
      %v1121 = vmul.f32 -1.0, %v1120
      %v1122 = vrcp.pop %v754
      %v1123 = vmul.f32 %v754, %v1122
      %v1124 = vsub.f32 1.0, %v1123
      %v1125 = vmul.f32 %v1122, %v1124
      %v1126 = vadd.f32 %v1122, %v1125
      %vm1127 = vweird.f32 %v754
      %vm1128 = vweird.f32 %v1122
      %vm1129 = vmor %vm1127, %vm1128
      %v1130 = vsel %vm1129, %v1122, %v1126
      %v1131 = vand.u32 2147483647, %v754
      %vm1132 = vcmp.eq.f32.partialorder %v1131, 8.507059e+37
      %v1133 = vand.u32 %v754, 2147483648
      %v1134 = vor.u32 1.1754944e-38, %v1133
      %v1135 = vsel %vm1132, %v1134, %v1130
      %v1136 = vmul.f32 -1.0, %v1135
      %v1137 = vrcp.pop %v755
      %v1138 = vmul.f32 %v755, %v1137
      %v1139 = vsub.f32 1.0, %v1138
      %v1140 = vmul.f32 %v1137, %v1139
      %v1141 = vadd.f32 %v1137, %v1140
      %vm1142 = vweird.f32 %v755
      %vm1143 = vweird.f32 %v1137
      %vm1144 = vmor %vm1142, %vm1143
      %v1145 = vsel %vm1144, %v1137, %v1141
      %v1146 = vand.u32 2147483647, %v755
      %vm1147 = vcmp.eq.f32.partialorder %v1146, 8.507059e+37
      %v1148 = vand.u32 %v755, 2147483648
      %v1149 = vor.u32 1.1754944e-38, %v1148
      %v1150 = vsel %vm1147, %v1149, %v1145
      %v1151 = vmul.f32 -1.0, %v1150
      %v1152 = vrcp.pop %v756
      %v1153 = vmul.f32 %v756, %v1152
      %v1154 = vsub.f32 1.0, %v1153
      %v1155 = vmul.f32 %v1152, %v1154
      %v1156 = vadd.f32 %v1152, %v1155
      %vm1157 = vweird.f32 %v756
      %vm1158 = vweird.f32 %v1152
      %vm1159 = vmor %vm1157, %vm1158
      %v1160 = vsel %vm1159, %v1152, %v1156
      %v1161 = vand.u32 2147483647, %v756
      %vm1162 = vcmp.eq.f32.partialorder %v1161, 8.507059e+37
      %v1163 = vand.u32 %v756, 2147483648
      %v1164 = vor.u32 1.1754944e-38, %v1163
      %v1165 = vsel %vm1162, %v1164, %v1160
      %v1166 = vmul.f32 -1.0, %v1165
      %v1167 = vrcp.pop %v757
      %v1168 = vmul.f32 %v757, %v1167
      %v1169 = vsub.f32 1.0, %v1168
      %v1170 = vmul.f32 %v1167, %v1169
      %v1171 = vadd.f32 %v1167, %v1170
      %vm1172 = vweird.f32 %v757
      %vm1173 = vweird.f32 %v1167
      %vm1174 = vmor %vm1172, %vm1173
      %v1175 = vsel %vm1174, %v1167, %v1171
      %v1176 = vand.u32 2147483647, %v757
      %vm1177 = vcmp.eq.f32.partialorder %v1176, 8.507059e+37
      %v1178 = vand.u32 %v757, 2147483648
      %v1179 = vor.u32 1.1754944e-38, %v1178
      %v1180 = vsel %vm1177, %v1179, %v1175
      %v1181 = vmul.f32 -1.0, %v1180
      %v1182 = vrcp.pop %v758
      %v1183 = vmul.f32 %v758, %v1182
      %v1184 = vsub.f32 1.0, %v1183
      %v1185 = vmul.f32 %v1182, %v1184
      %v1186 = vadd.f32 %v1182, %v1185
      %vm1187 = vweird.f32 %v758
      %vm1188 = vweird.f32 %v1182
      %vm1189 = vmor %vm1187, %vm1188
      %v1190 = vsel %vm1189, %v1182, %v1186
      %v1191 = vand.u32 2147483647, %v758
      %vm1192 = vcmp.eq.f32.partialorder %v1191, 8.507059e+37
      %v1193 = vand.u32 %v758, 2147483648
      %v1194 = vor.u32 1.1754944e-38, %v1193
      %v1195 = vsel %vm1192, %v1194, %v1190
      %v1196 = vmul.f32 -1.0, %v1195
      %v1197 = vrcp.pop %v759
      %v1198 = vmul.f32 %v759, %v1197
      %v1199 = vsub.f32 1.0, %v1198
      %v1200 = vmul.f32 %v1197, %v1199
      %v1201 = vadd.f32 %v1197, %v1200
      %vm1202 = vweird.f32 %v759
      %vm1203 = vweird.f32 %v1197
      %vm1204 = vmor %vm1202, %vm1203
      %v1205 = vsel %vm1204, %v1197, %v1201
      %v1206 = vand.u32 2147483647, %v759
      %vm1207 = vcmp.eq.f32.partialorder %v1206, 8.507059e+37
      %v1208 = vand.u32 %v759, 2147483648
      %v1209 = vor.u32 1.1754944e-38, %v1208
      %v1210 = vsel %vm1207, %v1209, %v1205
      %v1211 = vmul.f32 -1.0, %v1210
      %v1212 = vrcp.pop %v760
      %v1213 = vmul.f32 %v760, %v1212
      %v1214 = vsub.f32 1.0, %v1213
      %v1215 = vmul.f32 %v1212, %v1214
      %v1216 = vadd.f32 %v1212, %v1215
      %vm1217 = vweird.f32 %v760
      %vm1218 = vweird.f32 %v1212
      %vm1219 = vmor %vm1217, %vm1218
      %v1220 = vsel %vm1219, %v1212, %v1216
      %v1221 = vand.u32 2147483647, %v760
      %vm1222 = vcmp.eq.f32.partialorder %v1221, 8.507059e+37
      %v1223 = vand.u32 %v760, 2147483648
      %v1224 = vor.u32 1.1754944e-38, %v1223
      %v1225 = vsel %vm1222, %v1224, %v1220
      %v1226 = vmul.f32 -1.0, %v1225
      %v1227 = vrcp.pop %v761
      %v1228 = vmul.f32 %v761, %v1227
      %v1229 = vsub.f32 1.0, %v1228
      %v1230 = vmul.f32 %v1227, %v1229
      %v1231 = vadd.f32 %v1227, %v1230
      %vm1232 = vweird.f32 %v761
      %vm1233 = vweird.f32 %v1227
      %vm1234 = vmor %vm1232, %vm1233
      %v1235 = vsel %vm1234, %v1227, %v1231
      %v1236 = vand.u32 2147483647, %v761
      %vm1237 = vcmp.eq.f32.partialorder %v1236, 8.507059e+37
      %v1238 = vand.u32 %v761, 2147483648
      %v1239 = vor.u32 1.1754944e-38, %v1238
      %v1240 = vsel %vm1237, %v1239, %v1235
      %v1241 = vmul.f32 -1.0, %v1240
      %v1242 = vsub.f32 %v506, 1.0
      %v1243 = vsub.f32 %v507, 1.0
      %v1244 = vsub.f32 %v508, 1.0
      %v1245 = vsub.f32 %v509, 1.0
      %v1246 = vsub.f32 %v510, 1.0
      %v1247 = vsub.f32 %v511, 1.0
      %v1248 = vsub.f32 %v512, 1.0
      %v1249 = vsub.f32 %v513, 1.0
      %v1250 = vsub.f32 %v514, 1.0
      %v1251 = vsub.f32 %v515, 1.0
      %v1252 = vsub.f32 %v516, 1.0
      %v1253 = vsub.f32 %v517, 1.0
      %v1254 = vsub.f32 %v518, 1.0
      %v1255 = vsub.f32 %v519, 1.0
      %v1256 = vsub.f32 %v520, 1.0
      %v1257 = vsub.f32 %v521, 1.0
      %v1258 = vsub.f32 %v522, 1.0
      %v1259 = vsub.f32 %v523, 1.0
      %v1260 = vsub.f32 %v524, 1.0
      %v1261 = vsub.f32 %v525, 1.0
      %v1262 = vsub.f32 %v526, 1.0
      %v1263 = vsub.f32 %v527, 1.0
      %v1264 = vsub.f32 %v528, 1.0
      %v1265 = vsub.f32 %v529, 1.0
      %v1266 = vsub.f32 %v530, 1.0
      %v1267 = vsub.f32 %v531, 1.0
      %v1268 = vsub.f32 %v532, 1.0
      %v1269 = vsub.f32 %v533, 1.0
      %v1270 = vsub.f32 %v534, 1.0
      %v1271 = vsub.f32 %v535, 1.0
      %v1272 = vsub.f32 %v536, 1.0
      %v1273 = vsub.f32 %v537, 1.0
      %v1274 = vadd.f32 %v506, 1.0
      %v1275 = vadd.f32 %v507, 1.0
      %v1276 = vadd.f32 %v508, 1.0
      %v1277 = vadd.f32 %v509, 1.0
      %v1278 = vadd.f32 %v510, 1.0
      %v1279 = vadd.f32 %v511, 1.0
      %v1280 = vadd.f32 %v512, 1.0
      %v1281 = vadd.f32 %v513, 1.0
      %v1282 = vadd.f32 %v514, 1.0
      %v1283 = vadd.f32 %v515, 1.0
      %v1284 = vadd.f32 %v516, 1.0
      %v1285 = vadd.f32 %v517, 1.0
      %v1286 = vadd.f32 %v518, 1.0
      %v1287 = vadd.f32 %v519, 1.0
      %v1288 = vadd.f32 %v520, 1.0
      %v1289 = vadd.f32 %v521, 1.0
      %v1290 = vadd.f32 %v522, 1.0
      %v1291 = vadd.f32 %v523, 1.0
      %v1292 = vadd.f32 %v524, 1.0
      %v1293 = vadd.f32 %v525, 1.0
      %v1294 = vadd.f32 %v526, 1.0
      %v1295 = vadd.f32 %v527, 1.0
      %v1296 = vadd.f32 %v528, 1.0
      %v1297 = vadd.f32 %v529, 1.0
      %v1298 = vadd.f32 %v530, 1.0
      %v1299 = vadd.f32 %v531, 1.0
      %v1300 = vadd.f32 %v532, 1.0
      %v1301 = vadd.f32 %v533, 1.0
      %v1302 = vadd.f32 %v534, 1.0
      %v1303 = vadd.f32 %v535, 1.0
      %v1304 = vadd.f32 %v536, 1.0
      %v1305 = vadd.f32 %v537, 1.0
      %v1306 = vrcp.pop %v1274
      %v1307 = vmul.f32 %v1274, %v1306
      %v1308 = vsub.f32 1.0, %v1307
      %v1309 = vmul.f32 %v1306, %v1308
      %v1310 = vadd.f32 %v1306, %v1309
      %vm1311 = vweird.f32 %v1274
      %vm1312 = vweird.f32 %v1306
      %vm1313 = vmor %vm1311, %vm1312
      %v1314 = vsel %vm1313, %v1306, %v1310
      %v1315 = vand.u32 2147483647, %v1274
      %vm1316 = vcmp.eq.f32.partialorder %v1315, 8.507059e+37
      %v1317 = vand.u32 %v1274, 2147483648
      %v1318 = vor.u32 1.1754944e-38, %v1317
      %v1319 = vsel %vm1316, %v1318, %v1314
      %v1320 = vmul.f32 %v1242, %v1319
      %v1321 = vrcp.pop %v1275
      %v1322 = vmul.f32 %v1275, %v1321
      %v1323 = vsub.f32 1.0, %v1322
      %v1324 = vmul.f32 %v1321, %v1323
      %v1325 = vadd.f32 %v1321, %v1324
      %vm1326 = vweird.f32 %v1275
      %vm1327 = vweird.f32 %v1321
      %vm1328 = vmor %vm1326, %vm1327
      %v1329 = vsel %vm1328, %v1321, %v1325
      %v1330 = vand.u32 2147483647, %v1275
      %vm1331 = vcmp.eq.f32.partialorder %v1330, 8.507059e+37
      %v1332 = vand.u32 %v1275, 2147483648
      %v1333 = vor.u32 1.1754944e-38, %v1332
      %v1334 = vsel %vm1331, %v1333, %v1329
      %v1335 = vmul.f32 %v1243, %v1334
      %v1336 = vrcp.pop %v1276
      %v1337 = vmul.f32 %v1276, %v1336
      %v1338 = vsub.f32 1.0, %v1337
      %v1339 = vmul.f32 %v1336, %v1338
      %v1340 = vadd.f32 %v1336, %v1339
      %vm1341 = vweird.f32 %v1276
      %vm1342 = vweird.f32 %v1336
      %vm1343 = vmor %vm1341, %vm1342
      %v1344 = vsel %vm1343, %v1336, %v1340
      %v1345 = vand.u32 2147483647, %v1276
      %vm1346 = vcmp.eq.f32.partialorder %v1345, 8.507059e+37
      %v1347 = vand.u32 %v1276, 2147483648
      %v1348 = vor.u32 1.1754944e-38, %v1347
      %v1349 = vsel %vm1346, %v1348, %v1344
      %v1350 = vmul.f32 %v1244, %v1349
      %v1351 = vrcp.pop %v1277
      %v1352 = vmul.f32 %v1277, %v1351
      %v1353 = vsub.f32 1.0, %v1352
      %v1354 = vmul.f32 %v1351, %v1353
      %v1355 = vadd.f32 %v1351, %v1354
      %vm1356 = vweird.f32 %v1277
      %vm1357 = vweird.f32 %v1351
      %vm1358 = vmor %vm1356, %vm1357
      %v1359 = vsel %vm1358, %v1351, %v1355
      %v1360 = vand.u32 2147483647, %v1277
      %vm1361 = vcmp.eq.f32.partialorder %v1360, 8.507059e+37
      %v1362 = vand.u32 %v1277, 2147483648
      %v1363 = vor.u32 1.1754944e-38, %v1362
      %v1364 = vsel %vm1361, %v1363, %v1359
      %v1365 = vmul.f32 %v1245, %v1364
      %v1366 = vrcp.pop %v1278
      %v1367 = vmul.f32 %v1278, %v1366
      %v1368 = vsub.f32 1.0, %v1367
      %v1369 = vmul.f32 %v1366, %v1368
      %v1370 = vadd.f32 %v1366, %v1369
      %vm1371 = vweird.f32 %v1278
      %vm1372 = vweird.f32 %v1366
      %vm1373 = vmor %vm1371, %vm1372
      %v1374 = vsel %vm1373, %v1366, %v1370
      %v1375 = vand.u32 2147483647, %v1278
      %vm1376 = vcmp.eq.f32.partialorder %v1375, 8.507059e+37
      %v1377 = vand.u32 %v1278, 2147483648
      %v1378 = vor.u32 1.1754944e-38, %v1377
      %v1379 = vsel %vm1376, %v1378, %v1374
      %v1380 = vmul.f32 %v1246, %v1379
      %v1381 = vrcp.pop %v1279
      %v1382 = vmul.f32 %v1279, %v1381
      %v1383 = vsub.f32 1.0, %v1382
      %v1384 = vmul.f32 %v1381, %v1383
      %v1385 = vadd.f32 %v1381, %v1384
      %vm1386 = vweird.f32 %v1279
      %vm1387 = vweird.f32 %v1381
      %vm1388 = vmor %vm1386, %vm1387
      %v1389 = vsel %vm1388, %v1381, %v1385
      %v1390 = vand.u32 2147483647, %v1279
      %vm1391 = vcmp.eq.f32.partialorder %v1390, 8.507059e+37
      %v1392 = vand.u32 %v1279, 2147483648
      %v1393 = vor.u32 1.1754944e-38, %v1392
      %v1394 = vsel %vm1391, %v1393, %v1389
      %v1395 = vmul.f32 %v1247, %v1394
      %v1396 = vrcp.pop %v1280
      %v1397 = vmul.f32 %v1280, %v1396
      %v1398 = vsub.f32 1.0, %v1397
      %v1399 = vmul.f32 %v1396, %v1398
      %v1400 = vadd.f32 %v1396, %v1399
      %vm1401 = vweird.f32 %v1280
      %vm1402 = vweird.f32 %v1396
      %vm1403 = vmor %vm1401, %vm1402
      %v1404 = vsel %vm1403, %v1396, %v1400
      %v1405 = vand.u32 2147483647, %v1280
      %vm1406 = vcmp.eq.f32.partialorder %v1405, 8.507059e+37
      %v1407 = vand.u32 %v1280, 2147483648
      %v1408 = vor.u32 1.1754944e-38, %v1407
      %v1409 = vsel %vm1406, %v1408, %v1404
      %v1410 = vmul.f32 %v1248, %v1409
      %v1411 = vrcp.pop %v1281
      %v1412 = vmul.f32 %v1281, %v1411
      %v1413 = vsub.f32 1.0, %v1412
      %v1414 = vmul.f32 %v1411, %v1413
      %v1415 = vadd.f32 %v1411, %v1414
      %vm1416 = vweird.f32 %v1281
      %vm1417 = vweird.f32 %v1411
      %vm1418 = vmor %vm1416, %vm1417
      %v1419 = vsel %vm1418, %v1411, %v1415
      %v1420 = vand.u32 2147483647, %v1281
      %vm1421 = vcmp.eq.f32.partialorder %v1420, 8.507059e+37
      %v1422 = vand.u32 %v1281, 2147483648
      %v1423 = vor.u32 1.1754944e-38, %v1422
      %v1424 = vsel %vm1421, %v1423, %v1419
      %v1425 = vmul.f32 %v1249, %v1424
      %v1426 = vrcp.pop %v1282
      %v1427 = vmul.f32 %v1282, %v1426
      %v1428 = vsub.f32 1.0, %v1427
      %v1429 = vmul.f32 %v1426, %v1428
      %v1430 = vadd.f32 %v1426, %v1429
      %vm1431 = vweird.f32 %v1282
      %vm1432 = vweird.f32 %v1426
      %vm1433 = vmor %vm1431, %vm1432
      %v1434 = vsel %vm1433, %v1426, %v1430
      %v1435 = vand.u32 2147483647, %v1282
      %vm1436 = vcmp.eq.f32.partialorder %v1435, 8.507059e+37
      %v1437 = vand.u32 %v1282, 2147483648
      %v1438 = vor.u32 1.1754944e-38, %v1437
      %v1439 = vsel %vm1436, %v1438, %v1434
      %v1440 = vmul.f32 %v1250, %v1439
      %v1441 = vrcp.pop %v1283
      %v1442 = vmul.f32 %v1283, %v1441
      %v1443 = vsub.f32 1.0, %v1442
      %v1444 = vmul.f32 %v1441, %v1443
      %v1445 = vadd.f32 %v1441, %v1444
      %vm1446 = vweird.f32 %v1283
      %vm1447 = vweird.f32 %v1441
      %vm1448 = vmor %vm1446, %vm1447
      %v1449 = vsel %vm1448, %v1441, %v1445
      %v1450 = vand.u32 2147483647, %v1283
      %vm1451 = vcmp.eq.f32.partialorder %v1450, 8.507059e+37
      %v1452 = vand.u32 %v1283, 2147483648
      %v1453 = vor.u32 1.1754944e-38, %v1452
      %v1454 = vsel %vm1451, %v1453, %v1449
      %v1455 = vmul.f32 %v1251, %v1454
      %v1456 = vrcp.pop %v1284
      %v1457 = vmul.f32 %v1284, %v1456
      %v1458 = vsub.f32 1.0, %v1457
      %v1459 = vmul.f32 %v1456, %v1458
      %v1460 = vadd.f32 %v1456, %v1459
      %vm1461 = vweird.f32 %v1284
      %vm1462 = vweird.f32 %v1456
      %vm1463 = vmor %vm1461, %vm1462
      %v1464 = vsel %vm1463, %v1456, %v1460
      %v1465 = vand.u32 2147483647, %v1284
      %vm1466 = vcmp.eq.f32.partialorder %v1465, 8.507059e+37
      %v1467 = vand.u32 %v1284, 2147483648
      %v1468 = vor.u32 1.1754944e-38, %v1467
      %v1469 = vsel %vm1466, %v1468, %v1464
      %v1470 = vmul.f32 %v1252, %v1469
      %v1471 = vrcp.pop %v1285
      %v1472 = vmul.f32 %v1285, %v1471
      %v1473 = vsub.f32 1.0, %v1472
      %v1474 = vmul.f32 %v1471, %v1473
      %v1475 = vadd.f32 %v1471, %v1474
      %vm1476 = vweird.f32 %v1285
      %vm1477 = vweird.f32 %v1471
      %vm1478 = vmor %vm1476, %vm1477
      %v1479 = vsel %vm1478, %v1471, %v1475
      %v1480 = vand.u32 2147483647, %v1285
      %vm1481 = vcmp.eq.f32.partialorder %v1480, 8.507059e+37
      %v1482 = vand.u32 %v1285, 2147483648
      %v1483 = vor.u32 1.1754944e-38, %v1482
      %v1484 = vsel %vm1481, %v1483, %v1479
      %v1485 = vmul.f32 %v1253, %v1484
      %v1486 = vrcp.pop %v1286
      %v1487 = vmul.f32 %v1286, %v1486
      %v1488 = vsub.f32 1.0, %v1487
      %v1489 = vmul.f32 %v1486, %v1488
      %v1490 = vadd.f32 %v1486, %v1489
      %vm1491 = vweird.f32 %v1286
      %vm1492 = vweird.f32 %v1486
      %vm1493 = vmor %vm1491, %vm1492
      %v1494 = vsel %vm1493, %v1486, %v1490
      %v1495 = vand.u32 2147483647, %v1286
      %vm1496 = vcmp.eq.f32.partialorder %v1495, 8.507059e+37
      %v1497 = vand.u32 %v1286, 2147483648
      %v1498 = vor.u32 1.1754944e-38, %v1497
      %v1499 = vsel %vm1496, %v1498, %v1494
      %v1500 = vmul.f32 %v1254, %v1499
      %v1501 = vrcp.pop %v1287
      %v1502 = vmul.f32 %v1287, %v1501
      %v1503 = vsub.f32 1.0, %v1502
      %v1504 = vmul.f32 %v1501, %v1503
      %v1505 = vadd.f32 %v1501, %v1504
      %vm1506 = vweird.f32 %v1287
      %vm1507 = vweird.f32 %v1501
      %vm1508 = vmor %vm1506, %vm1507
      %v1509 = vsel %vm1508, %v1501, %v1505
      %v1510 = vand.u32 2147483647, %v1287
      %vm1511 = vcmp.eq.f32.partialorder %v1510, 8.507059e+37
      %v1512 = vand.u32 %v1287, 2147483648
      %v1513 = vor.u32 1.1754944e-38, %v1512
      %v1514 = vsel %vm1511, %v1513, %v1509
      %v1515 = vmul.f32 %v1255, %v1514
      %v1516 = vrcp.pop %v1288
      %v1517 = vmul.f32 %v1288, %v1516
      %v1518 = vsub.f32 1.0, %v1517
      %v1519 = vmul.f32 %v1516, %v1518
      %v1520 = vadd.f32 %v1516, %v1519
      %vm1521 = vweird.f32 %v1288
      %vm1522 = vweird.f32 %v1516
      %vm1523 = vmor %vm1521, %vm1522
      %v1524 = vsel %vm1523, %v1516, %v1520
      %v1525 = vand.u32 2147483647, %v1288
      %vm1526 = vcmp.eq.f32.partialorder %v1525, 8.507059e+37
      %v1527 = vand.u32 %v1288, 2147483648
      %v1528 = vor.u32 1.1754944e-38, %v1527
      %v1529 = vsel %vm1526, %v1528, %v1524
      %v1530 = vmul.f32 %v1256, %v1529
      %v1531 = vrcp.pop %v1289
      %v1532 = vmul.f32 %v1289, %v1531
      %v1533 = vsub.f32 1.0, %v1532
      %v1534 = vmul.f32 %v1531, %v1533
      %v1535 = vadd.f32 %v1531, %v1534
      %vm1536 = vweird.f32 %v1289
      %vm1537 = vweird.f32 %v1531
      %vm1538 = vmor %vm1536, %vm1537
      %v1539 = vsel %vm1538, %v1531, %v1535
      %v1540 = vand.u32 2147483647, %v1289
      %vm1541 = vcmp.eq.f32.partialorder %v1540, 8.507059e+37
      %v1542 = vand.u32 %v1289, 2147483648
      %v1543 = vor.u32 1.1754944e-38, %v1542
      %v1544 = vsel %vm1541, %v1543, %v1539
      %v1545 = vmul.f32 %v1257, %v1544
      %v1546 = vrcp.pop %v1290
      %v1547 = vmul.f32 %v1290, %v1546
      %v1548 = vsub.f32 1.0, %v1547
      %v1549 = vmul.f32 %v1546, %v1548
      %v1550 = vadd.f32 %v1546, %v1549
      %vm1551 = vweird.f32 %v1290
      %vm1552 = vweird.f32 %v1546
      %vm1553 = vmor %vm1551, %vm1552
      %v1554 = vsel %vm1553, %v1546, %v1550
      %v1555 = vand.u32 2147483647, %v1290
      %vm1556 = vcmp.eq.f32.partialorder %v1555, 8.507059e+37
      %v1557 = vand.u32 %v1290, 2147483648
      %v1558 = vor.u32 1.1754944e-38, %v1557
      %v1559 = vsel %vm1556, %v1558, %v1554
      %v1560 = vmul.f32 %v1258, %v1559
      %v1561 = vrcp.pop %v1291
      %v1562 = vmul.f32 %v1291, %v1561
      %v1563 = vsub.f32 1.0, %v1562
      %v1564 = vmul.f32 %v1561, %v1563
      %v1565 = vadd.f32 %v1561, %v1564
      %vm1566 = vweird.f32 %v1291
      %vm1567 = vweird.f32 %v1561
      %vm1568 = vmor %vm1566, %vm1567
      %v1569 = vsel %vm1568, %v1561, %v1565
      %v1570 = vand.u32 2147483647, %v1291
      %vm1571 = vcmp.eq.f32.partialorder %v1570, 8.507059e+37
      %v1572 = vand.u32 %v1291, 2147483648
      %v1573 = vor.u32 1.1754944e-38, %v1572
      %v1574 = vsel %vm1571, %v1573, %v1569
      %v1575 = vmul.f32 %v1259, %v1574
      %v1576 = vrcp.pop %v1292
      %v1577 = vmul.f32 %v1292, %v1576
      %v1578 = vsub.f32 1.0, %v1577
      %v1579 = vmul.f32 %v1576, %v1578
      %v1580 = vadd.f32 %v1576, %v1579
      %vm1581 = vweird.f32 %v1292
      %vm1582 = vweird.f32 %v1576
      %vm1583 = vmor %vm1581, %vm1582
      %v1584 = vsel %vm1583, %v1576, %v1580
      %v1585 = vand.u32 2147483647, %v1292
      %vm1586 = vcmp.eq.f32.partialorder %v1585, 8.507059e+37
      %v1587 = vand.u32 %v1292, 2147483648
      %v1588 = vor.u32 1.1754944e-38, %v1587
      %v1589 = vsel %vm1586, %v1588, %v1584
      %v1590 = vmul.f32 %v1260, %v1589
      %v1591 = vrcp.pop %v1293
      %v1592 = vmul.f32 %v1293, %v1591
      %v1593 = vsub.f32 1.0, %v1592
      %v1594 = vmul.f32 %v1591, %v1593
      %v1595 = vadd.f32 %v1591, %v1594
      %vm1596 = vweird.f32 %v1293
      %vm1597 = vweird.f32 %v1591
      %vm1598 = vmor %vm1596, %vm1597
      %v1599 = vsel %vm1598, %v1591, %v1595
      %v1600 = vand.u32 2147483647, %v1293
      %vm1601 = vcmp.eq.f32.partialorder %v1600, 8.507059e+37
      %v1602 = vand.u32 %v1293, 2147483648
      %v1603 = vor.u32 1.1754944e-38, %v1602
      %v1604 = vsel %vm1601, %v1603, %v1599
      %v1605 = vmul.f32 %v1261, %v1604
      %v1606 = vrcp.pop %v1294
      %v1607 = vmul.f32 %v1294, %v1606
      %v1608 = vsub.f32 1.0, %v1607
      %v1609 = vmul.f32 %v1606, %v1608
      %v1610 = vadd.f32 %v1606, %v1609
      %vm1611 = vweird.f32 %v1294
      %vm1612 = vweird.f32 %v1606
      %vm1613 = vmor %vm1611, %vm1612
      %v1614 = vsel %vm1613, %v1606, %v1610
      %v1615 = vand.u32 2147483647, %v1294
      %vm1616 = vcmp.eq.f32.partialorder %v1615, 8.507059e+37
      %v1617 = vand.u32 %v1294, 2147483648
      %v1618 = vor.u32 1.1754944e-38, %v1617
      %v1619 = vsel %vm1616, %v1618, %v1614
      %v1620 = vmul.f32 %v1262, %v1619
      %v1621 = vrcp.pop %v1295
      %v1622 = vmul.f32 %v1295, %v1621
      %v1623 = vsub.f32 1.0, %v1622
      %v1624 = vmul.f32 %v1621, %v1623
      %v1625 = vadd.f32 %v1621, %v1624
      %vm1626 = vweird.f32 %v1295
      %vm1627 = vweird.f32 %v1621
      %vm1628 = vmor %vm1626, %vm1627
      %v1629 = vsel %vm1628, %v1621, %v1625
      %v1630 = vand.u32 2147483647, %v1295
      %vm1631 = vcmp.eq.f32.partialorder %v1630, 8.507059e+37
      %v1632 = vand.u32 %v1295, 2147483648
      %v1633 = vor.u32 1.1754944e-38, %v1632
      %v1634 = vsel %vm1631, %v1633, %v1629
      %v1635 = vmul.f32 %v1263, %v1634
      %v1636 = vrcp.pop %v1296
      %v1637 = vmul.f32 %v1296, %v1636
      %v1638 = vsub.f32 1.0, %v1637
      %v1639 = vmul.f32 %v1636, %v1638
      %v1640 = vadd.f32 %v1636, %v1639
      %vm1641 = vweird.f32 %v1296
      %vm1642 = vweird.f32 %v1636
      %vm1643 = vmor %vm1641, %vm1642
      %v1644 = vsel %vm1643, %v1636, %v1640
      %v1645 = vand.u32 2147483647, %v1296
      %vm1646 = vcmp.eq.f32.partialorder %v1645, 8.507059e+37
      %v1647 = vand.u32 %v1296, 2147483648
      %v1648 = vor.u32 1.1754944e-38, %v1647
      %v1649 = vsel %vm1646, %v1648, %v1644
      %v1650 = vmul.f32 %v1264, %v1649
      %v1651 = vrcp.pop %v1297
      %v1652 = vmul.f32 %v1297, %v1651
      %v1653 = vsub.f32 1.0, %v1652
      %v1654 = vmul.f32 %v1651, %v1653
      %v1655 = vadd.f32 %v1651, %v1654
      %vm1656 = vweird.f32 %v1297
      %vm1657 = vweird.f32 %v1651
      %vm1658 = vmor %vm1656, %vm1657
      %v1659 = vsel %vm1658, %v1651, %v1655
      %v1660 = vand.u32 2147483647, %v1297
      %vm1661 = vcmp.eq.f32.partialorder %v1660, 8.507059e+37
      %v1662 = vand.u32 %v1297, 2147483648
      %v1663 = vor.u32 1.1754944e-38, %v1662
      %v1664 = vsel %vm1661, %v1663, %v1659
      %v1665 = vmul.f32 %v1265, %v1664
      %v1666 = vrcp.pop %v1298
      %v1667 = vmul.f32 %v1298, %v1666
      %v1668 = vsub.f32 1.0, %v1667
      %v1669 = vmul.f32 %v1666, %v1668
      %v1670 = vadd.f32 %v1666, %v1669
      %vm1671 = vweird.f32 %v1298
      %vm1672 = vweird.f32 %v1666
      %vm1673 = vmor %vm1671, %vm1672
      %v1674 = vsel %vm1673, %v1666, %v1670
      %v1675 = vand.u32 2147483647, %v1298
      %vm1676 = vcmp.eq.f32.partialorder %v1675, 8.507059e+37
      %v1677 = vand.u32 %v1298, 2147483648
      %v1678 = vor.u32 1.1754944e-38, %v1677
      %v1679 = vsel %vm1676, %v1678, %v1674
      %v1680 = vmul.f32 %v1266, %v1679
      %v1681 = vrcp.pop %v1299
      %v1682 = vmul.f32 %v1299, %v1681
      %v1683 = vsub.f32 1.0, %v1682
      %v1684 = vmul.f32 %v1681, %v1683
      %v1685 = vadd.f32 %v1681, %v1684
      %vm1686 = vweird.f32 %v1299
      %vm1687 = vweird.f32 %v1681
      %vm1688 = vmor %vm1686, %vm1687
      %v1689 = vsel %vm1688, %v1681, %v1685
      %v1690 = vand.u32 2147483647, %v1299
      %vm1691 = vcmp.eq.f32.partialorder %v1690, 8.507059e+37
      %v1692 = vand.u32 %v1299, 2147483648
      %v1693 = vor.u32 1.1754944e-38, %v1692
      %v1694 = vsel %vm1691, %v1693, %v1689
      %v1695 = vmul.f32 %v1267, %v1694
      %v1696 = vrcp.pop %v1300
      %v1697 = vmul.f32 %v1300, %v1696
      %v1698 = vsub.f32 1.0, %v1697
      %v1699 = vmul.f32 %v1696, %v1698
      %v1700 = vadd.f32 %v1696, %v1699
      %vm1701 = vweird.f32 %v1300
      %vm1702 = vweird.f32 %v1696
      %vm1703 = vmor %vm1701, %vm1702
      %v1704 = vsel %vm1703, %v1696, %v1700
      %v1705 = vand.u32 2147483647, %v1300
      %vm1706 = vcmp.eq.f32.partialorder %v1705, 8.507059e+37
      %v1707 = vand.u32 %v1300, 2147483648
      %v1708 = vor.u32 1.1754944e-38, %v1707
      %v1709 = vsel %vm1706, %v1708, %v1704
      %v1710 = vmul.f32 %v1268, %v1709
      %v1711 = vrcp.pop %v1301
      %v1712 = vmul.f32 %v1301, %v1711
      %v1713 = vsub.f32 1.0, %v1712
      %v1714 = vmul.f32 %v1711, %v1713
      %v1715 = vadd.f32 %v1711, %v1714
      %vm1716 = vweird.f32 %v1301
      %vm1717 = vweird.f32 %v1711
      %vm1718 = vmor %vm1716, %vm1717
      %v1719 = vsel %vm1718, %v1711, %v1715
      %v1720 = vand.u32 2147483647, %v1301
      %vm1721 = vcmp.eq.f32.partialorder %v1720, 8.507059e+37
      %v1722 = vand.u32 %v1301, 2147483648
      %v1723 = vor.u32 1.1754944e-38, %v1722
      %v1724 = vsel %vm1721, %v1723, %v1719
      %v1725 = vmul.f32 %v1269, %v1724
      %v1726 = vrcp.pop %v1302
      %v1727 = vmul.f32 %v1302, %v1726
      %v1728 = vsub.f32 1.0, %v1727
      %v1729 = vmul.f32 %v1726, %v1728
      %v1730 = vadd.f32 %v1726, %v1729
      %vm1731 = vweird.f32 %v1302
      %vm1732 = vweird.f32 %v1726
      %vm1733 = vmor %vm1731, %vm1732
      %v1734 = vsel %vm1733, %v1726, %v1730
      %v1735 = vand.u32 2147483647, %v1302
      %vm1736 = vcmp.eq.f32.partialorder %v1735, 8.507059e+37
      %v1737 = vand.u32 %v1302, 2147483648
      %v1738 = vor.u32 1.1754944e-38, %v1737
      %v1739 = vsel %vm1736, %v1738, %v1734
      %v1740 = vmul.f32 %v1270, %v1739
      %v1741 = vrcp.pop %v1303
      %v1742 = vmul.f32 %v1303, %v1741
      %v1743 = vsub.f32 1.0, %v1742
      %v1744 = vmul.f32 %v1741, %v1743
      %v1745 = vadd.f32 %v1741, %v1744
      %vm1746 = vweird.f32 %v1303
      %vm1747 = vweird.f32 %v1741
      %vm1748 = vmor %vm1746, %vm1747
      %v1749 = vsel %vm1748, %v1741, %v1745
      %v1750 = vand.u32 2147483647, %v1303
      %vm1751 = vcmp.eq.f32.partialorder %v1750, 8.507059e+37
      %v1752 = vand.u32 %v1303, 2147483648
      %v1753 = vor.u32 1.1754944e-38, %v1752
      %v1754 = vsel %vm1751, %v1753, %v1749
      %v1755 = vmul.f32 %v1271, %v1754
      %v1756 = vrcp.pop %v1304
      %v1757 = vmul.f32 %v1304, %v1756
      %v1758 = vsub.f32 1.0, %v1757
      %v1759 = vmul.f32 %v1756, %v1758
      %v1760 = vadd.f32 %v1756, %v1759
      %vm1761 = vweird.f32 %v1304
      %vm1762 = vweird.f32 %v1756
      %vm1763 = vmor %vm1761, %vm1762
      %v1764 = vsel %vm1763, %v1756, %v1760
      %v1765 = vand.u32 2147483647, %v1304
      %vm1766 = vcmp.eq.f32.partialorder %v1765, 8.507059e+37
      %v1767 = vand.u32 %v1304, 2147483648
      %v1768 = vor.u32 1.1754944e-38, %v1767
      %v1769 = vsel %vm1766, %v1768, %v1764
      %v1770 = vmul.f32 %v1272, %v1769
      %v1771 = vrcp.pop %v1305
      %v1772 = vmul.f32 %v1305, %v1771
      %v1773 = vsub.f32 1.0, %v1772
      %v1774 = vmul.f32 %v1771, %v1773
      %v1775 = vadd.f32 %v1771, %v1774
      %vm1776 = vweird.f32 %v1305
      %vm1777 = vweird.f32 %v1771
      %vm1778 = vmor %vm1776, %vm1777
      %v1779 = vsel %vm1778, %v1771, %v1775
      %v1780 = vand.u32 2147483647, %v1305
      %vm1781 = vcmp.eq.f32.partialorder %v1780, 8.507059e+37
      %v1782 = vand.u32 %v1305, 2147483648
      %v1783 = vor.u32 1.1754944e-38, %v1782
      %v1784 = vsel %vm1781, %v1783, %v1779
      %v1785 = vmul.f32 %v1273, %v1784
      %v1786 = vsel %vm698, %v1320, %v506
      %v1787 = vsel %vm699, %v1335, %v507
      %v1788 = vsel %vm700, %v1350, %v508
      %v1789 = vsel %vm701, %v1365, %v509
      %v1790 = vsel %vm702, %v1380, %v510
      %v1791 = vsel %vm703, %v1395, %v511
      %v1792 = vsel %vm704, %v1410, %v512
      %v1793 = vsel %vm705, %v1425, %v513
      %v1794 = vsel %vm706, %v1440, %v514
      %v1795 = vsel %vm707, %v1455, %v515
      %v1796 = vsel %vm708, %v1470, %v516
      %v1797 = vsel %vm709, %v1485, %v517
      %v1798 = vsel %vm710, %v1500, %v518
      %v1799 = vsel %vm711, %v1515, %v519
      %v1800 = vsel %vm712, %v1530, %v520
      %v1801 = vsel %vm713, %v1545, %v521
      %v1802 = vsel %vm714, %v1560, %v522
      %v1803 = vsel %vm715, %v1575, %v523
      %v1804 = vsel %vm716, %v1590, %v524
      %v1805 = vsel %vm717, %v1605, %v525
      %v1806 = vsel %vm718, %v1620, %v526
      %v1807 = vsel %vm719, %v1635, %v527
      %v1808 = vsel %vm720, %v1650, %v528
      %v1809 = vsel %vm721, %v1665, %v529
      %v1810 = vsel %vm722, %v1680, %v530
      %v1811 = vsel %vm723, %v1695, %v531
      %v1812 = vsel %vm724, %v1710, %v532
      %v1813 = vsel %vm725, %v1725, %v533
      %v1814 = vsel %vm726, %v1740, %v534
      %v1815 = vsel %vm727, %v1755, %v535
      %v1816 = vsel %vm728, %v1770, %v536
      %v1817 = vsel %vm729, %v1785, %v537
      %v1818 = vsel %vm602, %v776, %v1786
      %v1819 = vsel %vm603, %v791, %v1787
      %v1820 = vsel %vm604, %v806, %v1788
      %v1821 = vsel %vm605, %v821, %v1789
      %v1822 = vsel %vm606, %v836, %v1790
      %v1823 = vsel %vm607, %v851, %v1791
      %v1824 = vsel %vm608, %v866, %v1792
      %v1825 = vsel %vm609, %v881, %v1793
      %v1826 = vsel %vm610, %v896, %v1794
      %v1827 = vsel %vm611, %v911, %v1795
      %v1828 = vsel %vm612, %v926, %v1796
      %v1829 = vsel %vm613, %v941, %v1797
      %v1830 = vsel %vm614, %v956, %v1798
      %v1831 = vsel %vm615, %v971, %v1799
      %v1832 = vsel %vm616, %v986, %v1800
      %v1833 = vsel %vm617, %v1001, %v1801
      %v1834 = vsel %vm618, %v1016, %v1802
      %v1835 = vsel %vm619, %v1031, %v1803
      %v1836 = vsel %vm620, %v1046, %v1804
      %v1837 = vsel %vm621, %v1061, %v1805
      %v1838 = vsel %vm622, %v1076, %v1806
      %v1839 = vsel %vm623, %v1091, %v1807
      %v1840 = vsel %vm624, %v1106, %v1808
      %v1841 = vsel %vm625, %v1121, %v1809
      %v1842 = vsel %vm626, %v1136, %v1810
      %v1843 = vsel %vm627, %v1151, %v1811
      %v1844 = vsel %vm628, %v1166, %v1812
      %v1845 = vsel %vm629, %v1181, %v1813
      %v1846 = vsel %vm630, %v1196, %v1814
      %v1847 = vsel %vm631, %v1211, %v1815
      %v1848 = vsel %vm632, %v1226, %v1816
      %v1849 = vsel %vm633, %v1241, %v1817
      %v1850 = vsel %vm698, 0.7853982, 0.0
      %v1851 = vsel %vm699, 0.7853982, 0.0
      %v1852 = vsel %vm700, 0.7853982, 0.0
      %v1853 = vsel %vm701, 0.7853982, 0.0
      %v1854 = vsel %vm702, 0.7853982, 0.0
      %v1855 = vsel %vm703, 0.7853982, 0.0
      %v1856 = vsel %vm704, 0.7853982, 0.0
      %v1857 = vsel %vm705, 0.7853982, 0.0
      %v1858 = vsel %vm706, 0.7853982, 0.0
      %v1859 = vsel %vm707, 0.7853982, 0.0
      %v1860 = vsel %vm708, 0.7853982, 0.0
      %v1861 = vsel %vm709, 0.7853982, 0.0
      %v1862 = vsel %vm710, 0.7853982, 0.0
      %v1863 = vsel %vm711, 0.7853982, 0.0
      %v1864 = vsel %vm712, 0.7853982, 0.0
      %v1865 = vsel %vm713, 0.7853982, 0.0
      %v1866 = vsel %vm714, 0.7853982, 0.0
      %v1867 = vsel %vm715, 0.7853982, 0.0
      %v1868 = vsel %vm716, 0.7853982, 0.0
      %v1869 = vsel %vm717, 0.7853982, 0.0
      %v1870 = vsel %vm718, 0.7853982, 0.0
      %v1871 = vsel %vm719, 0.7853982, 0.0
      %v1872 = vsel %vm720, 0.7853982, 0.0
      %v1873 = vsel %vm721, 0.7853982, 0.0
      %v1874 = vsel %vm722, 0.7853982, 0.0
      %v1875 = vsel %vm723, 0.7853982, 0.0
      %v1876 = vsel %vm724, 0.7853982, 0.0
      %v1877 = vsel %vm725, 0.7853982, 0.0
      %v1878 = vsel %vm726, 0.7853982, 0.0
      %v1879 = vsel %vm727, 0.7853982, 0.0
      %v1880 = vsel %vm728, 0.7853982, 0.0
      %v1881 = vsel %vm729, 0.7853982, 0.0
      %v1882 = vsel %vm602, 1.5707964, %v1850
      %v1883 = vsel %vm603, 1.5707964, %v1851
      %v1884 = vsel %vm604, 1.5707964, %v1852
      %v1885 = vsel %vm605, 1.5707964, %v1853
      %v1886 = vsel %vm606, 1.5707964, %v1854
      %v1887 = vsel %vm607, 1.5707964, %v1855
      %v1888 = vsel %vm608, 1.5707964, %v1856
      %v1889 = vsel %vm609, 1.5707964, %v1857
      %v1890 = vsel %vm610, 1.5707964, %v1858
      %v1891 = vsel %vm611, 1.5707964, %v1859
      %v1892 = vsel %vm612, 1.5707964, %v1860
      %v1893 = vsel %vm613, 1.5707964, %v1861
      %v1894 = vsel %vm614, 1.5707964, %v1862
      %v1895 = vsel %vm615, 1.5707964, %v1863
      %v1896 = vsel %vm616, 1.5707964, %v1864
      %v1897 = vsel %vm617, 1.5707964, %v1865
      %v1898 = vsel %vm618, 1.5707964, %v1866
      %v1899 = vsel %vm619, 1.5707964, %v1867
      %v1900 = vsel %vm620, 1.5707964, %v1868
      %v1901 = vsel %vm621, 1.5707964, %v1869
      %v1902 = vsel %vm622, 1.5707964, %v1870
      %v1903 = vsel %vm623, 1.5707964, %v1871
      %v1904 = vsel %vm624, 1.5707964, %v1872
      %v1905 = vsel %vm625, 1.5707964, %v1873
      %v1906 = vsel %vm626, 1.5707964, %v1874
      %v1907 = vsel %vm627, 1.5707964, %v1875
      %v1908 = vsel %vm628, 1.5707964, %v1876
      %v1909 = vsel %vm629, 1.5707964, %v1877
      %v1910 = vsel %vm630, 1.5707964, %v1878
      %v1911 = vsel %vm631, 1.5707964, %v1879
      %v1912 = vsel %vm632, 1.5707964, %v1880
      %v1913 = vsel %vm633, 1.5707964, %v1881
      %v1914 = vmul.f32 %v1818, %v1818
      %v1915 = vmul.f32 %v1819, %v1819
      %v1916 = vmul.f32 %v1820, %v1820
      %v1917 = vmul.f32 %v1821, %v1821
      %v1918 = vmul.f32 %v1822, %v1822
      %v1919 = vmul.f32 %v1823, %v1823
      %v1920 = vmul.f32 %v1824, %v1824
      %v1921 = vmul.f32 %v1825, %v1825
      %v1922 = vmul.f32 %v1826, %v1826
      %v1923 = vmul.f32 %v1827, %v1827
      %v1924 = vmul.f32 %v1828, %v1828
      %v1925 = vmul.f32 %v1829, %v1829
      %v1926 = vmul.f32 %v1830, %v1830
      %v1927 = vmul.f32 %v1831, %v1831
      %v1928 = vmul.f32 %v1832, %v1832
      %v1929 = vmul.f32 %v1833, %v1833
      %v1930 = vmul.f32 %v1834, %v1834
      %v1931 = vmul.f32 %v1835, %v1835
      %v1932 = vmul.f32 %v1836, %v1836
      %v1933 = vmul.f32 %v1837, %v1837
      %v1934 = vmul.f32 %v1838, %v1838
      %v1935 = vmul.f32 %v1839, %v1839
      %v1936 = vmul.f32 %v1840, %v1840
      %v1937 = vmul.f32 %v1841, %v1841
      %v1938 = vmul.f32 %v1842, %v1842
      %v1939 = vmul.f32 %v1843, %v1843
      %v1940 = vmul.f32 %v1844, %v1844
      %v1941 = vmul.f32 %v1845, %v1845
      %v1942 = vmul.f32 %v1846, %v1846
      %v1943 = vmul.f32 %v1847, %v1847
      %v1944 = vmul.f32 %v1848, %v1848
      %v1945 = vmul.f32 %v1849, %v1849
      %v1946 = vmul.f32 %v1914, 0.080537446
      %v1947 = vmul.f32 %v1915, 0.080537446
      %v1948 = vmul.f32 %v1916, 0.080537446
      %v1949 = vmul.f32 %v1917, 0.080537446
      %v1950 = vmul.f32 %v1918, 0.080537446
      %v1951 = vmul.f32 %v1919, 0.080537446
      %v1952 = vmul.f32 %v1920, 0.080537446
      %v1953 = vmul.f32 %v1921, 0.080537446
      %v1954 = vmul.f32 %v1922, 0.080537446
      %v1955 = vmul.f32 %v1923, 0.080537446
      %v1956 = vmul.f32 %v1924, 0.080537446
      %v1957 = vmul.f32 %v1925, 0.080537446
      %v1958 = vmul.f32 %v1926, 0.080537446
      %v1959 = vmul.f32 %v1927, 0.080537446
      %v1960 = vmul.f32 %v1928, 0.080537446
      %v1961 = vmul.f32 %v1929, 0.080537446
      %v1962 = vmul.f32 %v1930, 0.080537446
      %v1963 = vmul.f32 %v1931, 0.080537446
      %v1964 = vmul.f32 %v1932, 0.080537446
      %v1965 = vmul.f32 %v1933, 0.080537446
      %v1966 = vmul.f32 %v1934, 0.080537446
      %v1967 = vmul.f32 %v1935, 0.080537446
      %v1968 = vmul.f32 %v1936, 0.080537446
      %v1969 = vmul.f32 %v1937, 0.080537446
      %v1970 = vmul.f32 %v1938, 0.080537446
      %v1971 = vmul.f32 %v1939, 0.080537446
      %v1972 = vmul.f32 %v1940, 0.080537446
      %v1973 = vmul.f32 %v1941, 0.080537446
      %v1974 = vmul.f32 %v1942, 0.080537446
      %v1975 = vmul.f32 %v1943, 0.080537446
      %v1976 = vmul.f32 %v1944, 0.080537446
      %v1977 = vmul.f32 %v1945, 0.080537446
      %v1978 = vsub.f32 %v1946, 0.13877685
      %v1979 = vsub.f32 %v1947, 0.13877685
      %v1980 = vsub.f32 %v1948, 0.13877685
      %v1981 = vsub.f32 %v1949, 0.13877685
      %v1982 = vsub.f32 %v1950, 0.13877685
      %v1983 = vsub.f32 %v1951, 0.13877685
      %v1984 = vsub.f32 %v1952, 0.13877685
      %v1985 = vsub.f32 %v1953, 0.13877685
      %v1986 = vsub.f32 %v1954, 0.13877685
      %v1987 = vsub.f32 %v1955, 0.13877685
      %v1988 = vsub.f32 %v1956, 0.13877685
      %v1989 = vsub.f32 %v1957, 0.13877685
      %v1990 = vsub.f32 %v1958, 0.13877685
      %v1991 = vsub.f32 %v1959, 0.13877685
      %v1992 = vsub.f32 %v1960, 0.13877685
      %v1993 = vsub.f32 %v1961, 0.13877685
      %v1994 = vsub.f32 %v1962, 0.13877685
      %v1995 = vsub.f32 %v1963, 0.13877685
      %v1996 = vsub.f32 %v1964, 0.13877685
      %v1997 = vsub.f32 %v1965, 0.13877685
      %v1998 = vsub.f32 %v1966, 0.13877685
      %v1999 = vsub.f32 %v1967, 0.13877685
      %v2000 = vsub.f32 %v1968, 0.13877685
      %v2001 = vsub.f32 %v1969, 0.13877685
      %v2002 = vsub.f32 %v1970, 0.13877685
      %v2003 = vsub.f32 %v1971, 0.13877685
      %v2004 = vsub.f32 %v1972, 0.13877685
      %v2005 = vsub.f32 %v1973, 0.13877685
      %v2006 = vsub.f32 %v1974, 0.13877685
      %v2007 = vsub.f32 %v1975, 0.13877685
      %v2008 = vsub.f32 %v1976, 0.13877685
      %v2009 = vsub.f32 %v1977, 0.13877685
      %v2010 = vmul.f32 %v1978, %v1914
      %v2011 = vmul.f32 %v1979, %v1915
      %v2012 = vmul.f32 %v1980, %v1916
      %v2013 = vmul.f32 %v1981, %v1917
      %v2014 = vmul.f32 %v1982, %v1918
      %v2015 = vmul.f32 %v1983, %v1919
      %v2016 = vmul.f32 %v1984, %v1920
      %v2017 = vmul.f32 %v1985, %v1921
      %v2018 = vmul.f32 %v1986, %v1922
      %v2019 = vmul.f32 %v1987, %v1923
      %v2020 = vmul.f32 %v1988, %v1924
      %v2021 = vmul.f32 %v1989, %v1925
      %v2022 = vmul.f32 %v1990, %v1926
      %v2023 = vmul.f32 %v1991, %v1927
      %v2024 = vmul.f32 %v1992, %v1928
      %v2025 = vmul.f32 %v1993, %v1929
      %v2026 = vmul.f32 %v1994, %v1930
      %v2027 = vmul.f32 %v1995, %v1931
      %v2028 = vmul.f32 %v1996, %v1932
      %v2029 = vmul.f32 %v1997, %v1933
      %v2030 = vmul.f32 %v1998, %v1934
      %v2031 = vmul.f32 %v1999, %v1935
      %v2032 = vmul.f32 %v2000, %v1936
      %v2033 = vmul.f32 %v2001, %v1937
      %v2034 = vmul.f32 %v2002, %v1938
      %v2035 = vmul.f32 %v2003, %v1939
      %v2036 = vmul.f32 %v2004, %v1940
      %v2037 = vmul.f32 %v2005, %v1941
      %v2038 = vmul.f32 %v2006, %v1942
      %v2039 = vmul.f32 %v2007, %v1943
      %v2040 = vmul.f32 %v2008, %v1944
      %v2041 = vmul.f32 %v2009, %v1945
      %v2042 = vadd.f32 %v2010, 0.19977711
      %v2043 = vadd.f32 %v2011, 0.19977711
      %v2044 = vadd.f32 %v2012, 0.19977711
      %v2045 = vadd.f32 %v2013, 0.19977711
      %v2046 = vadd.f32 %v2014, 0.19977711
      %v2047 = vadd.f32 %v2015, 0.19977711
      %v2048 = vadd.f32 %v2016, 0.19977711
      %v2049 = vadd.f32 %v2017, 0.19977711
      %v2050 = vadd.f32 %v2018, 0.19977711
      %v2051 = vadd.f32 %v2019, 0.19977711
      %v2052 = vadd.f32 %v2020, 0.19977711
      %v2053 = vadd.f32 %v2021, 0.19977711
      %v2054 = vadd.f32 %v2022, 0.19977711
      %v2055 = vadd.f32 %v2023, 0.19977711
      %v2056 = vadd.f32 %v2024, 0.19977711
      %v2057 = vadd.f32 %v2025, 0.19977711
      %v2058 = vadd.f32 %v2026, 0.19977711
      %v2059 = vadd.f32 %v2027, 0.19977711
      %v2060 = vadd.f32 %v2028, 0.19977711
      %v2061 = vadd.f32 %v2029, 0.19977711
      %v2062 = vadd.f32 %v2030, 0.19977711
      %v2063 = vadd.f32 %v2031, 0.19977711
      %v2064 = vadd.f32 %v2032, 0.19977711
      %v2065 = vadd.f32 %v2033, 0.19977711
      %v2066 = vadd.f32 %v2034, 0.19977711
      %v2067 = vadd.f32 %v2035, 0.19977711
      %v2068 = vadd.f32 %v2036, 0.19977711
      %v2069 = vadd.f32 %v2037, 0.19977711
      %v2070 = vadd.f32 %v2038, 0.19977711
      %v2071 = vadd.f32 %v2039, 0.19977711
      %v2072 = vadd.f32 %v2040, 0.19977711
      %v2073 = vadd.f32 %v2041, 0.19977711
      %v2074 = vmul.f32 %v2042, %v1914
      %v2075 = vmul.f32 %v2043, %v1915
      %v2076 = vmul.f32 %v2044, %v1916
      %v2077 = vmul.f32 %v2045, %v1917
      %v2078 = vmul.f32 %v2046, %v1918
      %v2079 = vmul.f32 %v2047, %v1919
      %v2080 = vmul.f32 %v2048, %v1920
      %v2081 = vmul.f32 %v2049, %v1921
      %v2082 = vmul.f32 %v2050, %v1922
      %v2083 = vmul.f32 %v2051, %v1923
      %v2084 = vmul.f32 %v2052, %v1924
      %v2085 = vmul.f32 %v2053, %v1925
      %v2086 = vmul.f32 %v2054, %v1926
      %v2087 = vmul.f32 %v2055, %v1927
      %v2088 = vmul.f32 %v2056, %v1928
      %v2089 = vmul.f32 %v2057, %v1929
      %v2090 = vmul.f32 %v2058, %v1930
      %v2091 = vmul.f32 %v2059, %v1931
      %v2092 = vmul.f32 %v2060, %v1932
      %v2093 = vmul.f32 %v2061, %v1933
      %v2094 = vmul.f32 %v2062, %v1934
      %v2095 = vmul.f32 %v2063, %v1935
      %v2096 = vmul.f32 %v2064, %v1936
      %v2097 = vmul.f32 %v2065, %v1937
      %v2098 = vmul.f32 %v2066, %v1938
      %v2099 = vmul.f32 %v2067, %v1939
      %v2100 = vmul.f32 %v2068, %v1940
      %v2101 = vmul.f32 %v2069, %v1941
      %v2102 = vmul.f32 %v2070, %v1942
      %v2103 = vmul.f32 %v2071, %v1943
      %v2104 = vmul.f32 %v2072, %v1944
      %v2105 = vmul.f32 %v2073, %v1945
      %v2106 = vsub.f32 %v2074, 0.3333295
      %v2107 = vsub.f32 %v2075, 0.3333295
      %v2108 = vsub.f32 %v2076, 0.3333295
      %v2109 = vsub.f32 %v2077, 0.3333295
      %v2110 = vsub.f32 %v2078, 0.3333295
      %v2111 = vsub.f32 %v2079, 0.3333295
      %v2112 = vsub.f32 %v2080, 0.3333295
      %v2113 = vsub.f32 %v2081, 0.3333295
      %v2114 = vsub.f32 %v2082, 0.3333295
      %v2115 = vsub.f32 %v2083, 0.3333295
      %v2116 = vsub.f32 %v2084, 0.3333295
      %v2117 = vsub.f32 %v2085, 0.3333295
      %v2118 = vsub.f32 %v2086, 0.3333295
      %v2119 = vsub.f32 %v2087, 0.3333295
      %v2120 = vsub.f32 %v2088, 0.3333295
      %v2121 = vsub.f32 %v2089, 0.3333295
      %v2122 = vsub.f32 %v2090, 0.3333295
      %v2123 = vsub.f32 %v2091, 0.3333295
      %v2124 = vsub.f32 %v2092, 0.3333295
      %v2125 = vsub.f32 %v2093, 0.3333295
      %v2126 = vsub.f32 %v2094, 0.3333295
      %v2127 = vsub.f32 %v2095, 0.3333295
      %v2128 = vsub.f32 %v2096, 0.3333295
      %v2129 = vsub.f32 %v2097, 0.3333295
      %v2130 = vsub.f32 %v2098, 0.3333295
      %v2131 = vsub.f32 %v2099, 0.3333295
      %v2132 = vsub.f32 %v2100, 0.3333295
      %v2133 = vsub.f32 %v2101, 0.3333295
      %v2134 = vsub.f32 %v2102, 0.3333295
      %v2135 = vsub.f32 %v2103, 0.3333295
      %v2136 = vsub.f32 %v2104, 0.3333295
      %v2137 = vsub.f32 %v2105, 0.3333295
      %v2138 = vmul.f32 %v2106, %v1914
      %v2139 = vmul.f32 %v2107, %v1915
      %v2140 = vmul.f32 %v2108, %v1916
      %v2141 = vmul.f32 %v2109, %v1917
      %v2142 = vmul.f32 %v2110, %v1918
      %v2143 = vmul.f32 %v2111, %v1919
      %v2144 = vmul.f32 %v2112, %v1920
      %v2145 = vmul.f32 %v2113, %v1921
      %v2146 = vmul.f32 %v2114, %v1922
      %v2147 = vmul.f32 %v2115, %v1923
      %v2148 = vmul.f32 %v2116, %v1924
      %v2149 = vmul.f32 %v2117, %v1925
      %v2150 = vmul.f32 %v2118, %v1926
      %v2151 = vmul.f32 %v2119, %v1927
      %v2152 = vmul.f32 %v2120, %v1928
      %v2153 = vmul.f32 %v2121, %v1929
      %v2154 = vmul.f32 %v2122, %v1930
      %v2155 = vmul.f32 %v2123, %v1931
      %v2156 = vmul.f32 %v2124, %v1932
      %v2157 = vmul.f32 %v2125, %v1933
      %v2158 = vmul.f32 %v2126, %v1934
      %v2159 = vmul.f32 %v2127, %v1935
      %v2160 = vmul.f32 %v2128, %v1936
      %v2161 = vmul.f32 %v2129, %v1937
      %v2162 = vmul.f32 %v2130, %v1938
      %v2163 = vmul.f32 %v2131, %v1939
      %v2164 = vmul.f32 %v2132, %v1940
      %v2165 = vmul.f32 %v2133, %v1941
      %v2166 = vmul.f32 %v2134, %v1942
      %v2167 = vmul.f32 %v2135, %v1943
      %v2168 = vmul.f32 %v2136, %v1944
      %v2169 = vmul.f32 %v2137, %v1945
      %v2170 = vmul.f32 %v2138, %v1818
      %v2171 = vmul.f32 %v2139, %v1819
      %v2172 = vmul.f32 %v2140, %v1820
      %v2173 = vmul.f32 %v2141, %v1821
      %v2174 = vmul.f32 %v2142, %v1822
      %v2175 = vmul.f32 %v2143, %v1823
      %v2176 = vmul.f32 %v2144, %v1824
      %v2177 = vmul.f32 %v2145, %v1825
      %v2178 = vmul.f32 %v2146, %v1826
      %v2179 = vmul.f32 %v2147, %v1827
      %v2180 = vmul.f32 %v2148, %v1828
      %v2181 = vmul.f32 %v2149, %v1829
      %v2182 = vmul.f32 %v2150, %v1830
      %v2183 = vmul.f32 %v2151, %v1831
      %v2184 = vmul.f32 %v2152, %v1832
      %v2185 = vmul.f32 %v2153, %v1833
      %v2186 = vmul.f32 %v2154, %v1834
      %v2187 = vmul.f32 %v2155, %v1835
      %v2188 = vmul.f32 %v2156, %v1836
      %v2189 = vmul.f32 %v2157, %v1837
      %v2190 = vmul.f32 %v2158, %v1838
      %v2191 = vmul.f32 %v2159, %v1839
      %v2192 = vmul.f32 %v2160, %v1840
      %v2193 = vmul.f32 %v2161, %v1841
      %v2194 = vmul.f32 %v2162, %v1842
      %v2195 = vmul.f32 %v2163, %v1843
      %v2196 = vmul.f32 %v2164, %v1844
      %v2197 = vmul.f32 %v2165, %v1845
      %v2198 = vmul.f32 %v2166, %v1846
      %v2199 = vmul.f32 %v2167, %v1847
      %v2200 = vmul.f32 %v2168, %v1848
      %v2201 = vmul.f32 %v2169, %v1849
      %v2202 = vadd.f32 %v1882, %v2170
      %v2203 = vadd.f32 %v1883, %v2171
      %v2204 = vadd.f32 %v1884, %v2172
      %v2205 = vadd.f32 %v1885, %v2173
      %v2206 = vadd.f32 %v1886, %v2174
      %v2207 = vadd.f32 %v1887, %v2175
      %v2208 = vadd.f32 %v1888, %v2176
      %v2209 = vadd.f32 %v1889, %v2177
      %v2210 = vadd.f32 %v1890, %v2178
      %v2211 = vadd.f32 %v1891, %v2179
      %v2212 = vadd.f32 %v1892, %v2180
      %v2213 = vadd.f32 %v1893, %v2181
      %v2214 = vadd.f32 %v1894, %v2182
      %v2215 = vadd.f32 %v1895, %v2183
      %v2216 = vadd.f32 %v1896, %v2184
      %v2217 = vadd.f32 %v1897, %v2185
      %v2218 = vadd.f32 %v1898, %v2186
      %v2219 = vadd.f32 %v1899, %v2187
      %v2220 = vadd.f32 %v1900, %v2188
      %v2221 = vadd.f32 %v1901, %v2189
      %v2222 = vadd.f32 %v1902, %v2190
      %v2223 = vadd.f32 %v1903, %v2191
      %v2224 = vadd.f32 %v1904, %v2192
      %v2225 = vadd.f32 %v1905, %v2193
      %v2226 = vadd.f32 %v1906, %v2194
      %v2227 = vadd.f32 %v1907, %v2195
      %v2228 = vadd.f32 %v1908, %v2196
      %v2229 = vadd.f32 %v1909, %v2197
      %v2230 = vadd.f32 %v1910, %v2198
      %v2231 = vadd.f32 %v1911, %v2199
      %v2232 = vadd.f32 %v1912, %v2200
      %v2233 = vadd.f32 %v1913, %v2201
      %v2234 = vadd.f32 %v2202, %v1818
      %v2235 = vadd.f32 %v2203, %v1819
      %v2236 = vadd.f32 %v2204, %v1820
      %v2237 = vadd.f32 %v2205, %v1821
      %v2238 = vadd.f32 %v2206, %v1822
      %v2239 = vadd.f32 %v2207, %v1823
      %v2240 = vadd.f32 %v2208, %v1824
      %v2241 = vadd.f32 %v2209, %v1825
      %v2242 = vadd.f32 %v2210, %v1826
      %v2243 = vadd.f32 %v2211, %v1827
      %v2244 = vadd.f32 %v2212, %v1828
      %v2245 = vadd.f32 %v2213, %v1829
      %v2246 = vadd.f32 %v2214, %v1830
      %v2247 = vadd.f32 %v2215, %v1831
      %v2248 = vadd.f32 %v2216, %v1832
      %v2249 = vadd.f32 %v2217, %v1833
      %v2250 = vadd.f32 %v2218, %v1834
      %v2251 = vadd.f32 %v2219, %v1835
      %v2252 = vadd.f32 %v2220, %v1836
      %v2253 = vadd.f32 %v2221, %v1837
      %v2254 = vadd.f32 %v2222, %v1838
      %v2255 = vadd.f32 %v2223, %v1839
      %v2256 = vadd.f32 %v2224, %v1840
      %v2257 = vadd.f32 %v2225, %v1841
      %v2258 = vadd.f32 %v2226, %v1842
      %v2259 = vadd.f32 %v2227, %v1843
      %v2260 = vadd.f32 %v2228, %v1844
      %v2261 = vadd.f32 %v2229, %v1845
      %v2262 = vadd.f32 %v2230, %v1846
      %v2263 = vadd.f32 %v2231, %v1847
      %v2264 = vadd.f32 %v2232, %v1848
      %v2265 = vadd.f32 %v2233, %v1849
      %v2266 = vmul.f32 %v570, %v2234
      %v2267 = vmul.f32 %v571, %v2235
      %v2268 = vmul.f32 %v572, %v2236
      %v2269 = vmul.f32 %v573, %v2237
      %v2270 = vmul.f32 %v574, %v2238
      %v2271 = vmul.f32 %v575, %v2239
      %v2272 = vmul.f32 %v576, %v2240
      %v2273 = vmul.f32 %v577, %v2241
      %v2274 = vmul.f32 %v578, %v2242
      %v2275 = vmul.f32 %v579, %v2243
      %v2276 = vmul.f32 %v580, %v2244
      %v2277 = vmul.f32 %v581, %v2245
      %v2278 = vmul.f32 %v582, %v2246
      %v2279 = vmul.f32 %v583, %v2247
      %v2280 = vmul.f32 %v584, %v2248
      %v2281 = vmul.f32 %v585, %v2249
      %v2282 = vmul.f32 %v586, %v2250
      %v2283 = vmul.f32 %v587, %v2251
      %v2284 = vmul.f32 %v588, %v2252
      %v2285 = vmul.f32 %v589, %v2253
      %v2286 = vmul.f32 %v590, %v2254
      %v2287 = vmul.f32 %v591, %v2255
      %v2288 = vmul.f32 %v592, %v2256
      %v2289 = vmul.f32 %v593, %v2257
      %v2290 = vmul.f32 %v594, %v2258
      %v2291 = vmul.f32 %v595, %v2259
      %v2292 = vmul.f32 %v596, %v2260
      %v2293 = vmul.f32 %v597, %v2261
      %v2294 = vmul.f32 %v598, %v2262
      %v2295 = vmul.f32 %v599, %v2263
      %v2296 = vmul.f32 %v600, %v2264
      %v2297 = vmul.f32 %v601, %v2265
      %v2298 = vmul.f32 %v2266, 2.0
      %v2299 = vmul.f32 %v2267, 2.0
      %v2300 = vmul.f32 %v2268, 2.0
      %v2301 = vmul.f32 %v2269, 2.0
      %v2302 = vmul.f32 %v2270, 2.0
      %v2303 = vmul.f32 %v2271, 2.0
      %v2304 = vmul.f32 %v2272, 2.0
      %v2305 = vmul.f32 %v2273, 2.0
      %v2306 = vmul.f32 %v2274, 2.0
      %v2307 = vmul.f32 %v2275, 2.0
      %v2308 = vmul.f32 %v2276, 2.0
      %v2309 = vmul.f32 %v2277, 2.0
      %v2310 = vmul.f32 %v2278, 2.0
      %v2311 = vmul.f32 %v2279, 2.0
      %v2312 = vmul.f32 %v2280, 2.0
      %v2313 = vmul.f32 %v2281, 2.0
      %v2314 = vmul.f32 %v2282, 2.0
      %v2315 = vmul.f32 %v2283, 2.0
      %v2316 = vmul.f32 %v2284, 2.0
      %v2317 = vmul.f32 %v2285, 2.0
      %v2318 = vmul.f32 %v2286, 2.0
      %v2319 = vmul.f32 %v2287, 2.0
      %v2320 = vmul.f32 %v2288, 2.0
      %v2321 = vmul.f32 %v2289, 2.0
      %v2322 = vmul.f32 %v2290, 2.0
      %v2323 = vmul.f32 %v2291, 2.0
      %v2324 = vmul.f32 %v2292, 2.0
      %v2325 = vmul.f32 %v2293, 2.0
      %v2326 = vmul.f32 %v2294, 2.0
      %v2327 = vmul.f32 %v2295, 2.0
      %v2328 = vmul.f32 %v2296, 2.0
      %v2329 = vmul.f32 %v2297, 2.0
      %v2330 = vadd.f32 %v2298, 3.1415927
      %v2331 = vadd.f32 %v2299, 3.1415927
      %v2332 = vadd.f32 %v2300, 3.1415927
      %v2333 = vadd.f32 %v2301, 3.1415927
      %v2334 = vadd.f32 %v2302, 3.1415927
      %v2335 = vadd.f32 %v2303, 3.1415927
      %v2336 = vadd.f32 %v2304, 3.1415927
      %v2337 = vadd.f32 %v2305, 3.1415927
      %v2338 = vadd.f32 %v2306, 3.1415927
      %v2339 = vadd.f32 %v2307, 3.1415927
      %v2340 = vadd.f32 %v2308, 3.1415927
      %v2341 = vadd.f32 %v2309, 3.1415927
      %v2342 = vadd.f32 %v2310, 3.1415927
      %v2343 = vadd.f32 %v2311, 3.1415927
      %v2344 = vadd.f32 %v2312, 3.1415927
      %v2345 = vadd.f32 %v2313, 3.1415927
      %v2346 = vadd.f32 %v2314, 3.1415927
      %v2347 = vadd.f32 %v2315, 3.1415927
      %v2348 = vadd.f32 %v2316, 3.1415927
      %v2349 = vadd.f32 %v2317, 3.1415927
      %v2350 = vadd.f32 %v2318, 3.1415927
      %v2351 = vadd.f32 %v2319, 3.1415927
      %v2352 = vadd.f32 %v2320, 3.1415927
      %v2353 = vadd.f32 %v2321, 3.1415927
      %v2354 = vadd.f32 %v2322, 3.1415927
      %v2355 = vadd.f32 %v2323, 3.1415927
      %v2356 = vadd.f32 %v2324, 3.1415927
      %v2357 = vadd.f32 %v2325, 3.1415927
      %v2358 = vadd.f32 %v2326, 3.1415927
      %v2359 = vadd.f32 %v2327, 3.1415927
      %v2360 = vadd.f32 %v2328, 3.1415927
      %v2361 = vadd.f32 %v2329, 3.1415927
      %v2362 = vmul.f32 %v2330, 0.15915494
      %v2363 = vmul.f32 %v2331, 0.15915494
      %v2364 = vmul.f32 %v2332, 0.15915494
      %v2365 = vmul.f32 %v2333, 0.15915494
      %v2366 = vmul.f32 %v2334, 0.15915494
      %v2367 = vmul.f32 %v2335, 0.15915494
      %v2368 = vmul.f32 %v2336, 0.15915494
      %v2369 = vmul.f32 %v2337, 0.15915494
      %v2370 = vmul.f32 %v2338, 0.15915494
      %v2371 = vmul.f32 %v2339, 0.15915494
      %v2372 = vmul.f32 %v2340, 0.15915494
      %v2373 = vmul.f32 %v2341, 0.15915494
      %v2374 = vmul.f32 %v2342, 0.15915494
      %v2375 = vmul.f32 %v2343, 0.15915494
      %v2376 = vmul.f32 %v2344, 0.15915494
      %v2377 = vmul.f32 %v2345, 0.15915494
      %v2378 = vmul.f32 %v2346, 0.15915494
      %v2379 = vmul.f32 %v2347, 0.15915494
      %v2380 = vmul.f32 %v2348, 0.15915494
      %v2381 = vmul.f32 %v2349, 0.15915494
      %v2382 = vmul.f32 %v2350, 0.15915494
      %v2383 = vmul.f32 %v2351, 0.15915494
      %v2384 = vmul.f32 %v2352, 0.15915494
      %v2385 = vmul.f32 %v2353, 0.15915494
      %v2386 = vmul.f32 %v2354, 0.15915494
      %v2387 = vmul.f32 %v2355, 0.15915494
      %v2388 = vmul.f32 %v2356, 0.15915494
      %v2389 = vmul.f32 %v2357, 0.15915494
      %v2390 = vmul.f32 %v2358, 0.15915494
      %v2391 = vmul.f32 %v2359, 0.15915494
      %v2392 = vmul.f32 %v2360, 0.15915494
      %v2393 = vmul.f32 %v2361, 0.15915494
      %v2394 = vadd.f32 %v2362, 0.6
      %v2395 = vadd.f32 %v2363, 0.6
      %v2396 = vadd.f32 %v2364, 0.6
      %v2397 = vadd.f32 %v2365, 0.6
      %v2398 = vadd.f32 %v2366, 0.6
      %v2399 = vadd.f32 %v2367, 0.6
      %v2400 = vadd.f32 %v2368, 0.6
      %v2401 = vadd.f32 %v2369, 0.6
      %v2402 = vadd.f32 %v2370, 0.6
      %v2403 = vadd.f32 %v2371, 0.6
      %v2404 = vadd.f32 %v2372, 0.6
      %v2405 = vadd.f32 %v2373, 0.6
      %v2406 = vadd.f32 %v2374, 0.6
      %v2407 = vadd.f32 %v2375, 0.6
      %v2408 = vadd.f32 %v2376, 0.6
      %v2409 = vadd.f32 %v2377, 0.6
      %v2410 = vadd.f32 %v2378, 0.6
      %v2411 = vadd.f32 %v2379, 0.6
      %v2412 = vadd.f32 %v2380, 0.6
      %v2413 = vadd.f32 %v2381, 0.6
      %v2414 = vadd.f32 %v2382, 0.6
      %v2415 = vadd.f32 %v2383, 0.6
      %v2416 = vadd.f32 %v2384, 0.6
      %v2417 = vadd.f32 %v2385, 0.6
      %v2418 = vadd.f32 %v2386, 0.6
      %v2419 = vadd.f32 %v2387, 0.6
      %v2420 = vadd.f32 %v2388, 0.6
      %v2421 = vadd.f32 %v2389, 0.6
      %v2422 = vadd.f32 %v2390, 0.6
      %v2423 = vadd.f32 %v2391, 0.6
      %v2424 = vadd.f32 %v2392, 0.6
      %v2425 = vadd.f32 %v2393, 0.6
      %v2426 = vlog2.pop %v2394
      %v2427 = vmul.f32 %v2426, 0.6931472
      %v2428 = vlog2.pop %v2395
      %v2429 = vmul.f32 %v2428, 0.6931472
      %v2430 = vlog2.pop %v2396
      %v2431 = vmul.f32 %v2430, 0.6931472
      %v2432 = vlog2.pop %v2397
      %v2433 = vmul.f32 %v2432, 0.6931472
      %v2434 = vlog2.pop %v2398
      %v2435 = vmul.f32 %v2434, 0.6931472
      %v2436 = vlog2.pop %v2399
      %v2437 = vmul.f32 %v2436, 0.6931472
      %v2438 = vlog2.pop %v2400
      %v2439 = vmul.f32 %v2438, 0.6931472
      %v2440 = vlog2.pop %v2401
      %v2441 = vmul.f32 %v2440, 0.6931472
      %v2442 = vlog2.pop %v2402
      %v2443 = vmul.f32 %v2442, 0.6931472
      %v2444 = vlog2.pop %v2403
      %v2445 = vmul.f32 %v2444, 0.6931472
      %v2446 = vlog2.pop %v2404
      %v2447 = vmul.f32 %v2446, 0.6931472
      %v2448 = vlog2.pop %v2405
      %v2449 = vmul.f32 %v2448, 0.6931472
      %v2450 = vlog2.pop %v2406
      %v2451 = vmul.f32 %v2450, 0.6931472
      %v2452 = vlog2.pop %v2407
      %v2453 = vmul.f32 %v2452, 0.6931472
      %v2454 = vlog2.pop %v2408
      %v2455 = vmul.f32 %v2454, 0.6931472
      %v2456 = vlog2.pop %v2409
      %v2457 = vmul.f32 %v2456, 0.6931472
      %v2458 = vlog2.pop %v2410
      %v2459 = vmul.f32 %v2458, 0.6931472
      %v2460 = vlog2.pop %v2411
      %v2461 = vmul.f32 %v2460, 0.6931472
      %v2462 = vlog2.pop %v2412
      %v2463 = vmul.f32 %v2462, 0.6931472
      %v2464 = vlog2.pop %v2413
      %v2465 = vmul.f32 %v2464, 0.6931472
      %v2466 = vlog2.pop %v2414
      %v2467 = vmul.f32 %v2466, 0.6931472
      %v2468 = vlog2.pop %v2415
      %v2469 = vmul.f32 %v2468, 0.6931472
      %v2470 = vlog2.pop %v2416
      %v2471 = vmul.f32 %v2470, 0.6931472
      %v2472 = vlog2.pop %v2417
      %v2473 = vmul.f32 %v2472, 0.6931472
      %v2474 = vlog2.pop %v2418
      %v2475 = vmul.f32 %v2474, 0.6931472
      %v2476 = vlog2.pop %v2419
      %v2477 = vmul.f32 %v2476, 0.6931472
      %v2478 = vlog2.pop %v2420
      %v2479 = vmul.f32 %v2478, 0.6931472
      %v2480 = vlog2.pop %v2421
      %v2481 = vmul.f32 %v2480, 0.6931472
      %v2482 = vlog2.pop %v2422
      %v2483 = vmul.f32 %v2482, 0.6931472
      %v2484 = vlog2.pop %v2423
      %v2485 = vmul.f32 %v2484, 0.6931472
      %v2486 = vlog2.pop %v2424
      %v2487 = vmul.f32 %v2486, 0.6931472
      %v2488 = vlog2.pop %v2425
      %v2489 = vmul.f32 %v2488, 0.6931472
      %v2490 = vadd.f32 %v2427, %v2431
      %v2491 = vadd.f32 %v2490, %v2435
      %vm2492 = vcmask 1040384
      %v2493 = vsel %vm2492, %v2439, 0.0
      %v2494 = vadd.f32 %v2491, %v2493
      %v2495 = vrot.slane %v2494, 4
      %v2496 = vadd.f32 %v2494, %v2495
      %v2497 = vrot.slane %v2496, 2
      %v2498 = vadd.f32 %v2496, %v2497
      %v2499 = vrot.slane %v2498, 1
      %v2500 = vadd.f32 %v2498, %v2499
      %v2501 = vadd.f32 %v2429, %v2433
      %v2502 = vadd.f32 %v2501, %v2437
      %v2503 = vsel %vm2492, %v2441, 0.0
      %v2504 = vadd.f32 %v2502, %v2503
      %v2505 = vrot.slane %v2504, 4
      %v2506 = vadd.f32 %v2504, %v2505
      %v2507 = vrot.slane %v2506, 2
      %v2508 = vadd.f32 %v2506, %v2507
      %v2509 = vrot.slane %v2508, 1
      %v2510 = vadd.f32 %v2508, %v2509
      %v2511 = vadd.f32 %v2443, %v2447
      %v2512 = vadd.f32 %v2511, %v2451
      %v2513 = vsel %vm2492, %v2455, 0.0
      %v2514 = vadd.f32 %v2512, %v2513
      %v2515 = vrot.slane %v2514, 4
      %v2516 = vadd.f32 %v2514, %v2515
      %v2517 = vrot.slane %v2516, 2
      %v2518 = vadd.f32 %v2516, %v2517
      %v2519 = vrot.slane %v2518, 1
      %v2520 = vadd.f32 %v2518, %v2519
      %v2521 = vadd.f32 %v2445, %v2449
      %v2522 = vadd.f32 %v2521, %v2453
      %v2523 = vsel %vm2492, %v2457, 0.0
      %v2524 = vadd.f32 %v2522, %v2523
      %v2525 = vrot.slane %v2524, 4
      %v2526 = vadd.f32 %v2524, %v2525
      %v2527 = vrot.slane %v2526, 2
      %v2528 = vadd.f32 %v2526, %v2527
      %v2529 = vrot.slane %v2528, 1
      %v2530 = vadd.f32 %v2528, %v2529
      %v2531 = vadd.f32 %v2459, %v2463
      %v2532 = vadd.f32 %v2531, %v2467
      %v2533 = vsel %vm2492, %v2471, 0.0
      %v2534 = vadd.f32 %v2532, %v2533
      %v2535 = vrot.slane %v2534, 4
      %v2536 = vadd.f32 %v2534, %v2535
      %v2537 = vrot.slane %v2536, 2
      %v2538 = vadd.f32 %v2536, %v2537
      %v2539 = vrot.slane %v2538, 1
      %v2540 = vadd.f32 %v2538, %v2539
      %v2541 = vadd.f32 %v2461, %v2465
      %v2542 = vadd.f32 %v2541, %v2469
      %v2543 = vsel %vm2492, %v2473, 0.0
      %v2544 = vadd.f32 %v2542, %v2543
      %v2545 = vrot.slane %v2544, 4
      %v2546 = vadd.f32 %v2544, %v2545
      %v2547 = vrot.slane %v2546, 2
      %v2548 = vadd.f32 %v2546, %v2547
      %v2549 = vrot.slane %v2548, 1
      %v2550 = vadd.f32 %v2548, %v2549
      %v2551 = vadd.f32 %v2475, %v2479
      %v2552 = vadd.f32 %v2551, %v2483
      %v2553 = vsel %vm2492, %v2487, 0.0
      %v2554 = vadd.f32 %v2552, %v2553
      %v2555 = vrot.slane %v2554, 4
      %v2556 = vadd.f32 %v2554, %v2555
      %v2557 = vrot.slane %v2556, 2
      %v2558 = vadd.f32 %v2556, %v2557
      %v2559 = vrot.slane %v2558, 1
      %v2560 = vadd.f32 %v2558, %v2559
      %v2561 = vadd.f32 %v2477, %v2481
      %v2562 = vadd.f32 %v2561, %v2485
      %v2563 = vsel %vm2492, %v2489, 0.0
      %v2564 = vadd.f32 %v2562, %v2563
      %v2565 = vrot.slane %v2564, 4
      %v2566 = vadd.f32 %v2564, %v2565
      %v2567 = vrot.slane %v2566, 2
      %v2568 = vadd.f32 %v2566, %v2567
      %v2569 = vrot.slane %v2568, 1
      %v2570 = vadd.f32 %v2568, %v2569
      %v2579 = vrot.slane %v2510, 4
      %v2580 = vrot.slane %v2530, 4
      %v2581 = vrot.slane %v2550, 4
      %v2582 = vrot.slane %v2570, 4
      %vm2583 = vcmask 1043456
      %v2584 = vsel %vm2583, %v2500, %v2579
      %v2585 = vsel %vm2583, %v2520, %v2580
      %v2586 = vsel %vm2583, %v2540, %v2581
      %v2587 = vsel %vm2583, %v2560, %v2582
      %v2588 = vrot.slane %v2585, 7
      %vm2589 = vcmask 1041409
      %v2590 = vsel %vm2589, %v2588, %v2584
      %vm2591 = vcmask 1045509
      %v2592 = vsel %vm2591, %v2588, %v2590
      %v2593 = vrot.slane %v2586, 6
      %vm2594 = vcmask 1042434
      %v2595 = vsel %vm2594, %v2593, %v2592
      %vm2596 = vcmask 1046534
      %v2597 = vsel %vm2596, %v2593, %v2595
      %v2598 = vrot.slane %v2587, 5
      %vm2599 = vcmask 1043459
      %v2600 = vsel %vm2599, %v2598, %v2597
      %vm2601 = vcmask 1047559
      %v2602 = vsel %vm2601, %v2598, %v2600
      %2604 = vst [vmem:[%s208] sm:$0xff] %v2602
      %s2605 = smul.u32 2, %s19
      %p2606 = scmp.lt.s32.totalorder %s18, 1
      %s2607 = scalar_select %p2606, %s18, 1
      %p2608 = scmp.lt.s32.totalorder %s2605, 1
      %s2609 = scalar_select %p2608, %s2605, 1
      %s2610 = smul.addr %s2607, 2
      %s2611 = sadd.s32 %s2609, %s2610
      %s2612 = smul.addr %s2611, 4
      %s2613 = scalar_lea.vmem %s3, %s2612
      // Predicated region
      $region33: #{dendrite_forward.1} parent=31 // pred_check
        %p2614 = pneg %p116
      $region34: #{dendrite_forward.1} parent=31 // pred_check_branch
        %2616 = sbr.rel (%p2614) target = $region36
      $region35: #{dendrite_forward.1} parent=31 // pred_region
        %s2617 = smul.u32 2, %s19
      $region36: #{dendrite_forward.1} parent=31 // pred_fallthru
        _
    $region32: #{dendrite_forward.1} parent=5 // pred_fallthru
      _
    %p2618 = scmp.le.s32.totalorder 2, %s9
    // Predicated region
    $region37: #{dendrite_forward.1} parent=5 // pred_check
      %p2619 = pneg %p2618
    $region38: #{dendrite_forward.1} parent=5 // pred_check_branch
      %2621 = sbr.rel (%p2619) target = $region40
    $region39: #{dendrite_forward.1} parent=5 // pred_region
      %s2622 = ssub.s32 %s9, 2
      // Predicated region
      $region41: #{dendrite_forward.1} parent=39 // pred_check
        %p2623 = pneg %p122
      $region42: #{dendrite_forward.1} parent=39 // pred_check_branch
        %2625 = sbr.rel (%p2623) target = $region44
      $region43: #{dendrite_forward.1} parent=39 // pred_region
        %s2626 = smul.u32 2, %s21
        %p2627 = scmp.lt.s32.totalorder %s20, 1
        %s2628 = scalar_select %p2627, %s20, 1
        %p2629 = scmp.lt.s32.totalorder %s2626, 1
        %s2630 = scalar_select %p2629, %s2626, 1
        %s2631 = smul.addr %s2628, 2
        %s2632 = sadd.s32 %s2630, %s2631
        %s2633 = smul.addr %s2632, 4
        %s2634 = scalar_lea.vmem %s3, %s2633
      $region44: #{dendrite_forward.1} parent=39 // pred_fallthru
        _
    $region40: #{dendrite_forward.1} parent=5 // pred_fallthru
      _
  $region6: #{dendrite_forward.1} parent=0 // loop_footer
    %s13 = sadd.s32 1, %s9
  $region7: #{dendrite_forward.1} parent=0 // loop_footer_branch
    %8 = sbr.rel target = $region3
  $region8: #{dendrite_forward.1} parent=0 // loop_exit
    _

</llo_original>
